<compile_context>
chip_gen: v7x
topology: tpu7x:2x2x1
jax: 0.10.0
libtpu: 0.0.40
codegen_flags: <defaults>
</compile_context>

<pallas_src>
import jax
import jax.numpy as jnp
from jax.experimental import pallas as pl
from jax.experimental.pallas import tpu as pltpu

BN_EPS = 1e-5


# ----------------------------------------------------------------------------
# Fused kernel: conv1 + ReLU + BN1 + conv2 + ReLU + avg_pool(8) + fc1 + ReLU + fc2
# ----------------------------------------------------------------------------
def tiny_model_kernel(p1_ref, w1_ref, b1_ref, g_ref, beta_ref,
                      w2_ref, b2_ref, w3_ref, b3_ref, w4_ref, b4_ref, o_ref):
    m1 = p1_ref.shape[0]           # N*H1*W1 conv1 output pixels (parity-ordered rows)
    n = o_ref.shape[0]             # batch
    c1 = w1_ref.shape[1]           # 16 conv1 output channels
    plane = m1 // (n * 4)          # 64 = H2*W2 rows per parity plane
    w2d = 8                        # W2 = conv2 output width (8x8 map feeds avg_pool2d(8))

    # ---- conv1 (im2col matmul) + bias + ReLU --------------------------------
    y = jnp.dot(p1_ref[...], w1_ref[...], preferred_element_type=jnp.float32)
    y = jnp.maximum(y + b1_ref[...], 0.0)                         # [m1, 16]

    # ---- BatchNorm2d (training-mode batch statistics), two-pass -------------
    mean = jnp.mean(y, axis=0, keepdims=True)
    d = y - mean
    var = jnp.mean(d * d, axis=0, keepdims=True)
    y = g_ref[...] * d * jax.lax.rsqrt(var + BN_EPS) + beta_ref[...]

    # ---- conv2 im2col, fully in VMEM via parity planes ----------------------
    # Rows are ordered (b, ih%2, iw%2, ih//2, iw//2).  A 3x3 / stride-2 / pad-1
    # tap (dy, dx) at output pixel (ho, wo) reads input (2ho+dy-1, 2wo+dx-1),
    # i.e. one of the four parity planes shifted by at most one output row/col.
    zero_blk = jnp.zeros((w2d, c1), jnp.float32)
    zero_row = jnp.zeros((1, c1), jnp.float32)
    row = jax.lax.broadcasted_iota(jnp.int32, (plane, 1), 0)
    w_mask = (row % w2d != 0).astype(jnp.float32)     # 0 on rows where wo == 0

    def shift_h(p):    # T[ho, wo] = P[ho-1, wo], zero at ho == 0
        return jnp.concatenate([zero_blk, p[:plane - w2d, :]], axis=0)

    def shift_w(p):    # T[ho, wo] = P[ho, wo-1], zero at wo == 0
        return jnp.concatenate([zero_row, p[:plane - 1, :]], axis=0) * w_mask

    batch_rows = []
    for b in range(n):                                # static unroll (tiny batch)
        base = b * 4 * plane
        ee = y[base             : base + plane,     :]   # (ih even, iw even)
        eo = y[base + plane     : base + 2 * plane, :]   # (ih even, iw odd)
        oe = y[base + 2 * plane : base + 3 * plane, :]   # (ih odd,  iw even)
        oo = y[base + 3 * plane : base + 4 * plane, :]   # (ih odd,  iw odd)
        taps = [shift_h(shift_w(oo)),   # (dy, dx) = (0, 0)
                shift_h(oe),            # (0, 1)
                shift_h(oo),            # (0, 2)
                shift_w(eo),            # (1, 0)
                ee,                     # (1, 1)
                eo,                     # (1, 2)
                shift_w(oo),            # (2, 0)
                oe,                     # (2, 1)
                oo]                     # (2, 2)
        batch_rows.append(jnp.concatenate(taps, axis=-1))    # [plane, 144]
    p2 = jnp.concatenate(batch_rows, axis=0)                  # [n*plane, 144]

    # ---- conv2: ONE fused K=144 MXU matmul + bias + ReLU ---------------------
    h = jnp.maximum(
        jnp.dot(p2, w2_ref[...], preferred_element_type=jnp.float32) + b2_ref[...],
        0.0)                                                   # [n*plane, 32]

    # ---- avg_pool2d(8) over the full 8x8 map: per-batch sublane mean ---------
    pooled = jnp.concatenate(
        [jnp.mean(h[b * plane:(b + 1) * plane, :], axis=0, keepdims=True)
         for b in range(n)], axis=0)                           # [n, 32]

    # ---- fc1 + ReLU + fc2 -----------------------------------------------------
    z = jnp.maximum(
        jnp.dot(pooled, w3_ref[...], preferred_element_type=jnp.float32) + b3_ref[...],
        0.0)
    o_ref[...] = jnp.dot(z, w4_ref[...], preferred_element_type=jnp.float32) + b4_ref[...]


# ----------------------------------------------------------------------------
# Glue: im2col for the FIRST conv only (input is tiny; no in-VMEM producer to fuse).
# ----------------------------------------------------------------------------
def im2col_3x3_s2_p1(x_nhwc):
    n, h, w, c = x_nhwc.shape
    ho, wo = h // 2, w // 2
    xp = jnp.pad(x_nhwc, ((0, 0), (1, 1), (1, 1), (0, 0)))
    cols = []
    for dy in range(3):
        for dx in range(3):
            cols.append(xp[:, dy:dy + 2 * ho:2, dx:dx + 2 * wo:2, :])
    # feature ordering (dy, dx, ci) matches the HWIO weight reshape [kH*kW*Cin, Cout]
    return jnp.concatenate(cols, axis=-1)     # [N, Ho, Wo, 9*C]


def _full_spec(shape):
    rank = len(shape)
    return pl.BlockSpec(shape, lambda i, _r=rank: (0,) * _r)


# ----------------------------------------------------------------------------
# TinyModel forward (single fused Pallas call, jitted)
# ----------------------------------------------------------------------------
@jax.jit
def tiny_model_forward(x_nchw, params):
    n = x_nchw.shape[0]
    x_nhwc = jnp.transpose(x_nchw, (0, 2, 3, 1))                # NCHW -> NHWC

    p1 = im2col_3x3_s2_p1(x_nhwc)                               # [N, 16, 16, 27]
    _, h1, w1, k1 = p1.shape
    # Reorder conv1 output rows by parity: (b, ih%2, iw%2, ih//2, iw//2) so the
    # kernel's conv2 im2col is pure contiguous slicing.
    p1 = p1.reshape(n, h1 // 2, 2, w1 // 2, 2, k1).transpose(0, 2, 4, 1, 3, 5)
    p1f = p1.reshape(n * h1 * w1, k1)                           # [512, 27]

    w1m = params["w1"].reshape(-1, params["w1"].shape[-1])      # [27, 16]   (HWIO)
    w2m = params["w2"].reshape(-1, params["w2"].shape[-1])      # [144, 32]  (HWIO)

    args = (p1f, w1m, params["b1"].reshape(1, -1),
            params["bn1_gamma"].reshape(1, -1), params["bn1_beta"].reshape(1, -1),
            w2m, params["b2"].reshape(1, -1),
            params["wfc1"], params["bfc1"].reshape(1, -1),
            params["wfc2"], params["bfc2"].reshape(1, -1))
    n_out = params["wfc2"].shape[1]

    return pl.pallas_call(
        tiny_model_kernel,
        out_shape=jax.ShapeDtypeStruct((n, n_out), jnp.float32),
        grid=(1,),
        in_specs=[_full_spec(a.shape) for a in args],
        out_specs=_full_spec((n, n_out)),
        compiler_params=pltpu.CompilerParams(dimension_semantics=("arbitrary",)),
    )(*args)


# ----------------------------------------------------------------------------
# Pure-JAX reference (for correctness check)
# ----------------------------------------------------------------------------
def tiny_model_reference(x_nchw, params):
    x = jnp.transpose(x_nchw, (0, 2, 3, 1))
    dn = ("NHWC", "HWIO", "NHWC")
    y = jax.lax.conv_general_dilated(x, params["w1"], (2, 2), ((1, 1), (1, 1)),
                                     dimension_numbers=dn) + params["b1"]
    y = jnp.maximum(y, 0.0)
    mean = jnp.mean(y, axis=(0, 1, 2), keepdims=True)
    var = jnp.mean((y - mean) ** 2, axis=(0, 1, 2), keepdims=True)
    y = params["bn1_gamma"] * (y - mean) * jax.lax.rsqrt(var + BN_EPS) + params["bn1_beta"]
    y = jax.lax.conv_general_dilated(y, params["w2"], (2, 2), ((1, 1), (1, 1)),
                                     dimension_numbers=dn) + params["b2"]
    y = jnp.maximum(y, 0.0)
    pooled = jnp.mean(y, axis=(1, 2))                           # avg_pool2d(8) on 8x8
    z = jnp.maximum(pooled @ params["wfc1"] + params["bfc1"], 0.0)
    return z @ params["wfc2"] + params["bfc2"]


def init_params(key):
    ks = jax.random.split(key, 8)
    return {
        "w1": jax.random.normal(ks[0], (3, 3, 3, 16), jnp.float32) * 0.2,     # HWIO
        "b1": jax.random.normal(ks[1], (16,), jnp.float32) * 0.05,
        "bn1_gamma": jnp.ones((16,), jnp.float32),                            # PyTorch default
        "bn1_beta": jnp.zeros((16,), jnp.float32),
        "w2": jax.random.normal(ks[2], (3, 3, 16, 32), jnp.float32) * 0.1,    # HWIO
        "b2": jax.random.normal(ks[3], (32,), jnp.float32) * 0.05,
        "wfc1": jax.random.normal(ks[4], (32, 64), jnp.float32) * 0.2,        # [in, out]
        "bfc1": jax.random.normal(ks[5], (64,), jnp.float32) * 0.05,
        "wfc2": jax.random.normal(ks[6], (64, 10), jnp.float32) * 0.2,        # [in, out]
        "bfc2": jax.random.normal(ks[7], (10,), jnp.float32) * 0.05,
    }


if __name__ == "__main__":
    key = jax.random.PRNGKey(0)
    k_x, k_p = jax.random.split(key)

    # Input must be 32x32 spatially so avg_pool2d(8) after two stride-2 convs is valid.
    x = jax.random.normal(k_x, (2, 3, 32, 32), jnp.float32)     # NCHW, like PyTorch
    params = init_params(k_p)

    out = tiny_model_forward(x, params)
    out = jax.block_until_ready(out)
    assert out.shape == (2, 10), out.shape

    ref = tiny_model_reference(x, params)
    # Tolerance absorbs the MXU's default-precision f32 matmul path used by both
    # the kernel and the XLA reference convolutions.
    assert bool(jnp.allclose(out, ref, rtol=5e-2, atol=5e-2)), (
        "mismatch vs reference: max abs diff = "
        f"{float(jnp.max(jnp.abs(out - ref)))}")

    print("KERNEL_OK")
</pallas_src>

<mosaic_0001>
module attributes {stable_mosaic.version = 11 : i64} {
  func.func @tiny_model_kernel(%arg0: i32, %arg1: memref<512x27xf32, #tpu.memory_space<vmem>>, %arg2: memref<27x16xf32, #tpu.memory_space<vmem>>, %arg3: memref<1x16xf32, #tpu.memory_space<vmem>>, %arg4: memref<1x16xf32, #tpu.memory_space<vmem>>, %arg5: memref<1x16xf32, #tpu.memory_space<vmem>>, %arg6: memref<144x32xf32, #tpu.memory_space<vmem>>, %arg7: memref<1x32xf32, #tpu.memory_space<vmem>>, %arg8: memref<32x64xf32, #tpu.memory_space<vmem>>, %arg9: memref<1x64xf32, #tpu.memory_space<vmem>>, %arg10: memref<64x10xf32, #tpu.memory_space<vmem>>, %arg11: memref<1x10xf32, #tpu.memory_space<vmem>>, %arg12: memref<2x10xf32, #tpu.memory_space<vmem>>) attributes {dimension_semantics = [#tpu.dimension_semantics<arbitrary>], iteration_bounds = array<i64: 1>, scalar_prefetch = 0 : i64, scratch_operands = 0 : i64, tpu.core_type = #tpu.core_type<tc>, window_params = [{pipeline_mode = #tpu.pipeline_mode<synchronous>, transform_indices = @transform_0, window_bounds = array<i64: 512, 27>}, {pipeline_mode = #tpu.pipeline_mode<synchronous>, transform_indices = @transform_1, window_bounds = array<i64: 27, 16>}, {pipeline_mode = #tpu.pipeline_mode<synchronous>, transform_indices = @transform_2, window_bounds = array<i64: 1, 16>}, {pipeline_mode = #tpu.pipeline_mode<synchronous>, transform_indices = @transform_3, window_bounds = array<i64: 1, 16>}, {pipeline_mode = #tpu.pipeline_mode<synchronous>, transform_indices = @transform_4, window_bounds = array<i64: 1, 16>}, {pipeline_mode = #tpu.pipeline_mode<synchronous>, transform_indices = @transform_5, window_bounds = array<i64: 144, 32>}, {pipeline_mode = #tpu.pipeline_mode<synchronous>, transform_indices = @transform_6, window_bounds = array<i64: 1, 32>}, {pipeline_mode = #tpu.pipeline_mode<synchronous>, transform_indices = @transform_7, window_bounds = array<i64: 32, 64>}, {pipeline_mode = #tpu.pipeline_mode<synchronous>, transform_indices = @transform_8, window_bounds = array<i64: 1, 64>}, {pipeline_mode = #tpu.pipeline_mode<synchronous>, transform_indices = @transform_9, window_bounds = array<i64: 64, 10>}, {pipeline_mode = #tpu.pipeline_mode<synchronous>, transform_indices = @transform_10, window_bounds = array<i64: 1, 10>}, {pipeline_mode = #tpu.pipeline_mode<synchronous>, transform_indices = @transform_11, window_bounds = array<i64: 2, 10>}]} {
    %c0 = arith.constant 0 : index
    %c0_0 = arith.constant 0 : index
    %0 = vector.load %arg1[%c0, %c0_0] : memref<512x27xf32, #tpu.memory_space<vmem>>, vector<512x27xf32>
    %c0_1 = arith.constant 0 : index
    %c0_2 = arith.constant 0 : index
    %1 = vector.load %arg2[%c0_1, %c0_2] : memref<27x16xf32, #tpu.memory_space<vmem>>, vector<27x16xf32>
    %cst = arith.constant dense<0.000000e+00> : vector<512x16xf32>
    %2 = tpu.matmul %0, %1, %cst {dimension_numbers = #tpu.dot_dimension_numbers<[1], [0], [0], [1], [0, 0, 1, 1], [], []>} : vector<512x27xf32>, vector<27x16xf32>, vector<512x16xf32> -> vector<512x16xf32>
    %c0_3 = arith.constant 0 : index
    %c0_4 = arith.constant 0 : index
    %3 = vector.load %arg3[%c0_3, %c0_4] : memref<1x16xf32, #tpu.memory_space<vmem>>, vector<1x16xf32>
    %4 = vector.broadcast %3 : vector<1x16xf32> to vector<512x16xf32>
    %5 = arith.addf %2, %4 : vector<512x16xf32>
    %cst_5 = arith.constant 0.000000e+00 : f32
    %6 = vector.broadcast %cst_5 : f32 to vector<512x16xf32>
    %7 = arith.maximumf %5, %6 : vector<512x16xf32>
    %cst_6 = arith.constant dense<0.000000e+00> : vector<16xf32>
    %8 = vector.multi_reduction <add>, %7, %cst_6 [0] : vector<512x16xf32> to vector<16xf32>
    %9 = vector.shape_cast %8 : vector<16xf32> to vector<1x16xf32>
    %cst_7 = arith.constant 5.120000e+02 : f32
    %10 = vector.broadcast %cst_7 : f32 to vector<1x16xf32>
    %11 = arith.divf %9, %10 : vector<1x16xf32>
    %12 = vector.broadcast %11 : vector<1x16xf32> to vector<512x16xf32>
    %13 = arith.subf %7, %12 : vector<512x16xf32>
    %14 = arith.mulf %13, %13 : vector<512x16xf32>
    %cst_8 = arith.constant dense<0.000000e+00> : vector<16xf32>
    %15 = vector.multi_reduction <add>, %14, %cst_8 [0] : vector<512x16xf32> to vector<16xf32>
    %16 = vector.shape_cast %15 : vector<16xf32> to vector<1x16xf32>
    %cst_9 = arith.constant 5.120000e+02 : f32
    %17 = vector.broadcast %cst_9 : f32 to vector<1x16xf32>
    %18 = arith.divf %16, %17 : vector<1x16xf32>
    %c0_10 = arith.constant 0 : index
    %c0_11 = arith.constant 0 : index
    %19 = vector.load %arg4[%c0_10, %c0_11] : memref<1x16xf32, #tpu.memory_space<vmem>>, vector<1x16xf32>
    %20 = vector.broadcast %19 : vector<1x16xf32> to vector<512x16xf32>
    %21 = arith.mulf %20, %13 : vector<512x16xf32>
    %cst_12 = arith.constant 9.99999974E-6 : f32
    %22 = vector.broadcast %cst_12 : f32 to vector<1x16xf32>
    %23 = arith.addf %18, %22 : vector<1x16xf32>
    %24 = math.rsqrt %23 : vector<1x16xf32>
    %25 = vector.broadcast %24 : vector<1x16xf32> to vector<512x16xf32>
    %26 = arith.mulf %21, %25 : vector<512x16xf32>
    %c0_13 = arith.constant 0 : index
    %c0_14 = arith.constant 0 : index
    %27 = vector.load %arg5[%c0_13, %c0_14] : memref<1x16xf32, #tpu.memory_space<vmem>>, vector<1x16xf32>
    %28 = vector.broadcast %27 : vector<1x16xf32> to vector<512x16xf32>
    %29 = arith.addf %26, %28 : vector<512x16xf32>
    %cst_15 = arith.constant 0.000000e+00 : f32
    %30 = vector.broadcast %cst_15 : f32 to vector<8x16xf32>
    %cst_16 = arith.constant 0.000000e+00 : f32
    %31 = vector.broadcast %cst_16 : f32 to vector<1x16xf32>
    %32 = tpu.iota {dimensions = array<i32: 0>} : vector<64x1xi32>
    %c8_i32 = arith.constant 8 : i32
    %c0_i32 = arith.constant 0 : i32
    %33 = arith.cmpi eq, %c8_i32, %c0_i32 : i32
    %c1_i32 = arith.constant 1 : i32
    %34 = arith.select %33, %c1_i32, %c8_i32 : i32
    %35 = vector.broadcast %34 : i32 to vector<64x1xi32>
    %36 = arith.remsi %32, %35 : vector<64x1xi32>
    %c0_i32_17 = arith.constant 0 : i32
    %37 = vector.broadcast %c0_i32_17 : i32 to vector<64x1xi32>
    %38 = arith.cmpi ne, %36, %37 : vector<64x1xi32>
    %c0_i32_18 = arith.constant 0 : i32
    %39 = vector.broadcast %c0_i32_18 : i32 to vector<64x1xi32>
    %40 = arith.cmpi slt, %36, %39 : vector<64x1xi32>
    %c0_i32_19 = arith.constant 0 : i32
    %41 = arith.cmpi slt, %34, %c0_i32_19 : i32
    %42 = vector.broadcast %41 : i1 to vector<64x1xi1>
    %43 = vector.broadcast %42 : vector<64x1xi1> to vector<64x1xi1>
    %44 = arith.xori %40, %43 : vector<64x1xi1>
    %45 = arith.andi %44, %38 : vector<64x1xi1>
    %46 = vector.broadcast %34 : i32 to vector<64x1xi32>
    %47 = arith.addi %36, %46 : vector<64x1xi32>
    %48 = arith.select %45, %47, %36 : vector<64x1xi1>, vector<64x1xi32>
    %c0_i32_20 = arith.constant 0 : i32
    %49 = vector.broadcast %c0_i32_20 : i32 to vector<64x1xi32>
    %50 = arith.cmpi ne, %48, %49 : vector<64x1xi32>
    %51 = arith.extui %50 : vector<64x1xi1> to vector<64x1xi32>
    %52 = arith.sitofp %51 : vector<64x1xi32> to vector<64x1xf32>
    %53 = vector.extract_strided_slice %29 {offsets = [0, 0], sizes = [64, 16], strides = [1, 1]} : vector<512x16xf32> to vector<64x16xf32>
    %54 = vector.extract_strided_slice %29 {offsets = [64, 0], sizes = [64, 16], strides = [1, 1]} : vector<512x16xf32> to vector<64x16xf32>
    %55 = vector.extract_strided_slice %29 {offsets = [128, 0], sizes = [64, 16], strides = [1, 1]} : vector<512x16xf32> to vector<64x16xf32>
    %56 = vector.extract_strided_slice %29 {offsets = [192, 0], sizes = [64, 16], strides = [1, 1]} : vector<512x16xf32> to vector<64x16xf32>
    %57 = vector.extract_strided_slice %56 {offsets = [0, 0], sizes = [63, 16], strides = [1, 1]} : vector<64x16xf32> to vector<63x16xf32>
    %58 = tpu.concatenate %31, %57 in 0 : vector<1x16xf32>, vector<63x16xf32> -> vector<64x16xf32>
    %59 = vector.broadcast %52 : vector<64x1xf32> to vector<64x16xf32>
    %60 = arith.mulf %58, %59 : vector<64x16xf32>
    %61 = vector.extract_strided_slice %60 {offsets = [0, 0], sizes = [56, 16], strides = [1, 1]} : vector<64x16xf32> to vector<56x16xf32>
    %62 = tpu.concatenate %30, %61 in 0 : vector<8x16xf32>, vector<56x16xf32> -> vector<64x16xf32>
    %63 = vector.extract_strided_slice %55 {offsets = [0, 0], sizes = [56, 16], strides = [1, 1]} : vector<64x16xf32> to vector<56x16xf32>
    %64 = tpu.concatenate %30, %63 in 0 : vector<8x16xf32>, vector<56x16xf32> -> vector<64x16xf32>
    %65 = vector.extract_strided_slice %56 {offsets = [0, 0], sizes = [56, 16], strides = [1, 1]} : vector<64x16xf32> to vector<56x16xf32>
    %66 = tpu.concatenate %30, %65 in 0 : vector<8x16xf32>, vector<56x16xf32> -> vector<64x16xf32>
    %67 = vector.extract_strided_slice %54 {offsets = [0, 0], sizes = [63, 16], strides = [1, 1]} : vector<64x16xf32> to vector<63x16xf32>
    %68 = tpu.concatenate %31, %67 in 0 : vector<1x16xf32>, vector<63x16xf32> -> vector<64x16xf32>
    %69 = vector.broadcast %52 : vector<64x1xf32> to vector<64x16xf32>
    %70 = arith.mulf %68, %69 : vector<64x16xf32>
    %71 = vector.extract_strided_slice %56 {offsets = [0, 0], sizes = [63, 16], strides = [1, 1]} : vector<64x16xf32> to vector<63x16xf32>
    %72 = tpu.concatenate %31, %71 in 0 : vector<1x16xf32>, vector<63x16xf32> -> vector<64x16xf32>
    %73 = vector.broadcast %52 : vector<64x1xf32> to vector<64x16xf32>
    %74 = arith.mulf %72, %73 : vector<64x16xf32>
    %75 = tpu.concatenate %62, %64, %66, %70, %53, %54, %74, %55, %56 in 1 : vector<64x16xf32>, vector<64x16xf32>, vector<64x16xf32>, vector<64x16xf32>, vector<64x16xf32>, vector<64x16xf32>, vector<64x16xf32>, vector<64x16xf32>, vector<64x16xf32> -> vector<64x144xf32>
    %76 = vector.extract_strided_slice %29 {offsets = [256, 0], sizes = [64, 16], strides = [1, 1]} : vector<512x16xf32> to vector<64x16xf32>
    %77 = vector.extract_strided_slice %29 {offsets = [320, 0], sizes = [64, 16], strides = [1, 1]} : vector<512x16xf32> to vector<64x16xf32>
    %78 = vector.extract_strided_slice %29 {offsets = [384, 0], sizes = [64, 16], strides = [1, 1]} : vector<512x16xf32> to vector<64x16xf32>
    %79 = vector.extract_strided_slice %29 {offsets = [448, 0], sizes = [64, 16], strides = [1, 1]} : vector<512x16xf32> to vector<64x16xf32>
    %80 = vector.extract_strided_slice %79 {offsets = [0, 0], sizes = [63, 16], strides = [1, 1]} : vector<64x16xf32> to vector<63x16xf32>
    %81 = tpu.concatenate %31, %80 in 0 : vector<1x16xf32>, vector<63x16xf32> -> vector<64x16xf32>
    %82 = vector.broadcast %52 : vector<64x1xf32> to vector<64x16xf32>
    %83 = arith.mulf %81, %82 : vector<64x16xf32>
    %84 = vector.extract_strided_slice %83 {offsets = [0, 0], sizes = [56, 16], strides = [1, 1]} : vector<64x16xf32> to vector<56x16xf32>
    %85 = tpu.concatenate %30, %84 in 0 : vector<8x16xf32>, vector<56x16xf32> -> vector<64x16xf32>
    %86 = vector.extract_strided_slice %78 {offsets = [0, 0], sizes = [56, 16], strides = [1, 1]} : vector<64x16xf32> to vector<56x16xf32>
    %87 = tpu.concatenate %30, %86 in 0 : vector<8x16xf32>, vector<56x16xf32> -> vector<64x16xf32>
    %88 = vector.extract_strided_slice %79 {offsets = [0, 0], sizes = [56, 16], strides = [1, 1]} : vector<64x16xf32> to vector<56x16xf32>
    %89 = tpu.concatenate %30, %88 in 0 : vector<8x16xf32>, vector<56x16xf32> -> vector<64x16xf32>
    %90 = vector.extract_strided_slice %77 {offsets = [0, 0], sizes = [63, 16], strides = [1, 1]} : vector<64x16xf32> to vector<63x16xf32>
    %91 = tpu.concatenate %31, %90 in 0 : vector<1x16xf32>, vector<63x16xf32> -> vector<64x16xf32>
    %92 = vector.broadcast %52 : vector<64x1xf32> to vector<64x16xf32>
    %93 = arith.mulf %91, %92 : vector<64x16xf32>
    %94 = vector.extract_strided_slice %79 {offsets = [0, 0], sizes = [63, 16], strides = [1, 1]} : vector<64x16xf32> to vector<63x16xf32>
    %95 = tpu.concatenate %31, %94 in 0 : vector<1x16xf32>, vector<63x16xf32> -> vector<64x16xf32>
    %96 = vector.broadcast %52 : vector<64x1xf32> to vector<64x16xf32>
    %97 = arith.mulf %95, %96 : vector<64x16xf32>
    %98 = tpu.concatenate %85, %87, %89, %93, %76, %77, %97, %78, %79 in 1 : vector<64x16xf32>, vector<64x16xf32>, vector<64x16xf32>, vector<64x16xf32>, vector<64x16xf32>, vector<64x16xf32>, vector<64x16xf32>, vector<64x16xf32>, vector<64x16xf32> -> vector<64x144xf32>
    %99 = tpu.concatenate %75, %98 in 0 : vector<64x144xf32>, vector<64x144xf32> -> vector<128x144xf32>
    %c0_21 = arith.constant 0 : index
    %c0_22 = arith.constant 0 : index
    %100 = vector.load %arg6[%c0_21, %c0_22] : memref<144x32xf32, #tpu.memory_space<vmem>>, vector<144x32xf32>
    %cst_23 = arith.constant dense<0.000000e+00> : vector<128x32xf32>
    %101 = tpu.matmul %99, %100, %cst_23 {dimension_numbers = #tpu.dot_dimension_numbers<[1], [0], [0], [1], [0, 0, 1, 1], [], []>} : vector<128x144xf32>, vector<144x32xf32>, vector<128x32xf32> -> vector<128x32xf32>
    %c0_24 = arith.constant 0 : index
    %c0_25 = arith.constant 0 : index
    %102 = vector.load %arg7[%c0_24, %c0_25] : memref<1x32xf32, #tpu.memory_space<vmem>>, vector<1x32xf32>
    %103 = vector.broadcast %102 : vector<1x32xf32> to vector<128x32xf32>
    %104 = arith.addf %101, %103 : vector<128x32xf32>
    %cst_26 = arith.constant 0.000000e+00 : f32
    %105 = vector.broadcast %cst_26 : f32 to vector<128x32xf32>
    %106 = arith.maximumf %104, %105 : vector<128x32xf32>
    %107 = vector.extract_strided_slice %106 {offsets = [0, 0], sizes = [64, 32], strides = [1, 1]} : vector<128x32xf32> to vector<64x32xf32>
    %cst_27 = arith.constant dense<0.000000e+00> : vector<32xf32>
    %108 = vector.multi_reduction <add>, %107, %cst_27 [0] : vector<64x32xf32> to vector<32xf32>
    %109 = vector.shape_cast %108 : vector<32xf32> to vector<1x32xf32>
    %cst_28 = arith.constant 6.400000e+01 : f32
    %110 = vector.broadcast %cst_28 : f32 to vector<1x32xf32>
    %111 = arith.divf %109, %110 : vector<1x32xf32>
    %112 = vector.extract_strided_slice %106 {offsets = [64, 0], sizes = [64, 32], strides = [1, 1]} : vector<128x32xf32> to vector<64x32xf32>
    %cst_29 = arith.constant dense<0.000000e+00> : vector<32xf32>
    %113 = vector.multi_reduction <add>, %112, %cst_29 [0] : vector<64x32xf32> to vector<32xf32>
    %114 = vector.shape_cast %113 : vector<32xf32> to vector<1x32xf32>
    %cst_30 = arith.constant 6.400000e+01 : f32
    %115 = vector.broadcast %cst_30 : f32 to vector<1x32xf32>
    %116 = arith.divf %114, %115 : vector<1x32xf32>
    %117 = tpu.concatenate %111, %116 in 0 : vector<1x32xf32>, vector<1x32xf32> -> vector<2x32xf32>
    %c0_31 = arith.constant 0 : index
    %c0_32 = arith.constant 0 : index
    %118 = vector.load %arg8[%c0_31, %c0_32] : memref<32x64xf32, #tpu.memory_space<vmem>>, vector<32x64xf32>
    %cst_33 = arith.constant dense<0.000000e+00> : vector<2x64xf32>
    %119 = tpu.matmul %117, %118, %cst_33 {dimension_numbers = #tpu.dot_dimension_numbers<[1], [0], [0], [1], [0, 0, 1, 1], [], []>} : vector<2x32xf32>, vector<32x64xf32>, vector<2x64xf32> -> vector<2x64xf32>
    %c0_34 = arith.constant 0 : index
    %c0_35 = arith.constant 0 : index
    %120 = vector.load %arg9[%c0_34, %c0_35] : memref<1x64xf32, #tpu.memory_space<vmem>>, vector<1x64xf32>
    %121 = vector.broadcast %120 : vector<1x64xf32> to vector<2x64xf32>
    %122 = arith.addf %119, %121 : vector<2x64xf32>
    %cst_36 = arith.constant 0.000000e+00 : f32
    %123 = vector.broadcast %cst_36 : f32 to vector<2x64xf32>
    %124 = arith.maximumf %122, %123 : vector<2x64xf32>
    %c0_37 = arith.constant 0 : index
    %c0_38 = arith.constant 0 : index
    %125 = vector.load %arg10[%c0_37, %c0_38] : memref<64x10xf32, #tpu.memory_space<vmem>>, vector<64x10xf32>
    %cst_39 = arith.constant dense<0.000000e+00> : vector<2x10xf32>
    %126 = tpu.matmul %124, %125, %cst_39 {dimension_numbers = #tpu.dot_dimension_numbers<[1], [0], [0], [1], [0, 0, 1, 1], [], []>} : vector<2x64xf32>, vector<64x10xf32>, vector<2x10xf32> -> vector<2x10xf32>
    %c0_40 = arith.constant 0 : index
    %c0_41 = arith.constant 0 : index
    %127 = vector.load %arg11[%c0_40, %c0_41] : memref<1x10xf32, #tpu.memory_space<vmem>>, vector<1x10xf32>
    %128 = vector.broadcast %127 : vector<1x10xf32> to vector<2x10xf32>
    %129 = arith.addf %126, %128 : vector<2x10xf32>
    %c0_42 = arith.constant 0 : index
    %c0_43 = arith.constant 0 : index
    %130 = vector.load %arg12[%c0_42, %c0_43] : memref<2x10xf32, #tpu.memory_space<vmem>>, vector<2x10xf32>
    tpu.vector_store %arg12[%c0_42, %c0_43], %129 {strides = array<i32>} : memref<2x10xf32, #tpu.memory_space<vmem>>, vector<2x10xf32>,
    return
  }
  func.func @transform_0(%arg0: i32) -> (i32, i32) {
    %c0_i32 = arith.constant 0 : i32
    %c0_i32_0 = arith.constant 0 : i32
    %c0_i32_1 = arith.constant 0 : i32
    return %c0_i32, %c0_i32_0 : i32, i32
  }
  func.func @transform_1(%arg0: i32) -> (i32, i32) {
    %c0_i32 = arith.constant 0 : i32
    %c0_i32_0 = arith.constant 0 : i32
    %c0_i32_1 = arith.constant 0 : i32
    return %c0_i32, %c0_i32_0 : i32, i32
  }
  func.func @transform_2(%arg0: i32) -> (i32, i32) {
    %c0_i32 = arith.constant 0 : i32
    %c0_i32_0 = arith.constant 0 : i32
    %c0_i32_1 = arith.constant 0 : i32
    return %c0_i32, %c0_i32_0 : i32, i32
  }
  func.func @transform_3(%arg0: i32) -> (i32, i32) {
    %c0_i32 = arith.constant 0 : i32
    %c0_i32_0 = arith.constant 0 : i32
    %c0_i32_1 = arith.constant 0 : i32
    return %c0_i32, %c0_i32_0 : i32, i32
  }
  func.func @transform_4(%arg0: i32) -> (i32, i32) {
    %c0_i32 = arith.constant 0 : i32
    %c0_i32_0 = arith.constant 0 : i32
    %c0_i32_1 = arith.constant 0 : i32
    return %c0_i32, %c0_i32_0 : i32, i32
  }
  func.func @transform_5(%arg0: i32) -> (i32, i32) {
    %c0_i32 = arith.constant 0 : i32
    %c0_i32_0 = arith.constant 0 : i32
    %c0_i32_1 = arith.constant 0 : i32
    return %c0_i32, %c0_i32_0 : i32, i32
  }
  func.func @transform_6(%arg0: i32) -> (i32, i32) {
    %c0_i32 = arith.constant 0 : i32
    %c0_i32_0 = arith.constant 0 : i32
    %c0_i32_1 = arith.constant 0 : i32
    return %c0_i32, %c0_i32_0 : i32, i32
  }
  func.func @transform_7(%arg0: i32) -> (i32, i32) {
    %c0_i32 = arith.constant 0 : i32
    %c0_i32_0 = arith.constant 0 : i32
    %c0_i32_1 = arith.constant 0 : i32
    return %c0_i32, %c0_i32_0 : i32, i32
  }
  func.func @transform_8(%arg0: i32) -> (i32, i32) {
    %c0_i32 = arith.constant 0 : i32
    %c0_i32_0 = arith.constant 0 : i32
    %c0_i32_1 = arith.constant 0 : i32
    return %c0_i32, %c0_i32_0 : i32, i32
  }
  func.func @transform_9(%arg0: i32) -> (i32, i32) {
    %c0_i32 = arith.constant 0 : i32
    %c0_i32_0 = arith.constant 0 : i32
    %c0_i32_1 = arith.constant 0 : i32
    return %c0_i32, %c0_i32_0 : i32, i32
  }
  func.func @transform_10(%arg0: i32) -> (i32, i32) {
    %c0_i32 = arith.constant 0 : i32
    %c0_i32_0 = arith.constant 0 : i32
    %c0_i32_1 = arith.constant 0 : i32
    return %c0_i32, %c0_i32_0 : i32, i32
  }
  func.func @transform_11(%arg0: i32) -> (i32, i32) {
    %c0_i32 = arith.constant 0 : i32
    %c0_i32_0 = arith.constant 0 : i32
    %c0_i32_1 = arith.constant 0 : i32
    return %c0_i32, %c0_i32_0 : i32, i32
  }
}

</mosaic_0001>

<llo_original>
// kernel: tiny_model_forward.1
$region0: #{tiny_model_forward.1}
  #allocation0 [shape = 'u32[]', space=smem, size = 0x4, offset = 0x4, fixed_abs, tag = 'smem constant byte address 0x4 - core index']
  #allocation1 [shape = 'u32[144,128]{1,0:T(1,128)}', space=vmem, size = 0x12000, scoped, tag = 'internal scratch']
  %s0 = inlined_call_operand.vmem [shape: f32[512,27], index: 0, kind: input, shape index: {}]
  %s1 = inlined_call_operand.vmem [shape: f32[27,16], index: 1, kind: input, shape index: {}]
  %s2 = inlined_call_operand.vmem [shape: f32[1,16], index: 2, kind: input, shape index: {}]
  %s3 = inlined_call_operand.vmem [shape: f32[1,16], index: 3, kind: input, shape index: {}]
  %s4 = inlined_call_operand.vmem [shape: f32[1,16], index: 4, kind: input, shape index: {}]
  %s5 = inlined_call_operand.vmem [shape: f32[144,32], index: 5, kind: input, shape index: {}]
  %s6 = inlined_call_operand.vmem [shape: f32[1,32], index: 6, kind: input, shape index: {}]
  %s7 = inlined_call_operand.vmem [shape: f32[32,64], index: 7, kind: input, shape index: {}]
  %s8 = inlined_call_operand.vmem [shape: f32[1,64], index: 8, kind: input, shape index: {}]
  %s9 = inlined_call_operand.vmem [shape: f32[64,10], index: 9, kind: input, shape index: {}]
  %s10 = inlined_call_operand.vmem [shape: f32[1,10], index: 10, kind: input, shape index: {}]
  %s11 = inlined_call_operand.hbm [shape: f32[2,10], index: 11, kind: output, shape index: {}]
  %s12 = sld [smem:[#allocation0]]
  $region54: #{tiny_model_forward.1} parent=0
    _
  %s14 = ssub.s32 1, %s12
  %s15 = scalar_select 0, %s14, %s12
  $region1: #{tiny_model_forward.1} parent=0
    #allocation2 [shape = 'u8[1024]{0}', space=vmem, size = 0x400, scoped, tag = 'output window, operand 0, single buffered']
    #allocation3 [shape = 's32[1]{0}', space=sflag, size = 0x4, scoped, tag = 'scoped memory for tiny_model_forward.1']
    %16 = vsyncpa [#allocation3], 0
    // Predicated region
    $region2: #{tiny_model_forward.1} parent=1 // pred_check
      _
    $region3: #{tiny_model_forward.1} parent=1 // pred_check_branch
      %18 = sbr.rel (0) target = $region5
    $region4: #{tiny_model_forward.1} parent=1 // pred_region
      _
    $region5: #{tiny_model_forward.1} parent=1 // pred_fallthru
      _
    // Predicated region
    $region6: #{tiny_model_forward.1} parent=1 // pred_check
      _
    $region7: #{tiny_model_forward.1} parent=1 // pred_check_branch
      %20 = sbr.rel (0) target = $region9
    $region8: #{tiny_model_forward.1} parent=1 // pred_region
      _
    $region9: #{tiny_model_forward.1} parent=1 // pred_fallthru
      _
    // Predicated region
    $region10: #{tiny_model_forward.1} parent=1 // pred_check
      _
    $region11: #{tiny_model_forward.1} parent=1 // pred_check_branch
      %22 = sbr.rel (0) target = $region13
    $region12: #{tiny_model_forward.1} parent=1 // pred_region
      _
    $region13: #{tiny_model_forward.1} parent=1 // pred_fallthru
      _
    // Predicated region
    $region14: #{tiny_model_forward.1} parent=1 // pred_check
      _
    $region15: #{tiny_model_forward.1} parent=1 // pred_check_branch
      %24 = sbr.rel (0) target = $region17
    $region16: #{tiny_model_forward.1} parent=1 // pred_region
      _
    $region17: #{tiny_model_forward.1} parent=1 // pred_fallthru
      _
    // Predicated region
    $region18: #{tiny_model_forward.1} parent=1 // pred_check
      _
    $region19: #{tiny_model_forward.1} parent=1 // pred_check_branch
      %26 = sbr.rel (0) target = $region21
    $region20: #{tiny_model_forward.1} parent=1 // pred_region
      _
    $region21: #{tiny_model_forward.1} parent=1 // pred_fallthru
      _
    // Predicated region
    $region22: #{tiny_model_forward.1} parent=1 // pred_check
      _
    $region23: #{tiny_model_forward.1} parent=1 // pred_check_branch
      %28 = sbr.rel (0) target = $region25
    $region24: #{tiny_model_forward.1} parent=1 // pred_region
      _
    $region25: #{tiny_model_forward.1} parent=1 // pred_fallthru
      _
    // Predicated region
    $region26: #{tiny_model_forward.1} parent=1 // pred_check
      _
    $region27: #{tiny_model_forward.1} parent=1 // pred_check_branch
      %30 = sbr.rel (0) target = $region29
    $region28: #{tiny_model_forward.1} parent=1 // pred_region
      _
    $region29: #{tiny_model_forward.1} parent=1 // pred_fallthru
      _
    // Predicated region
    $region30: #{tiny_model_forward.1} parent=1 // pred_check
      _
    $region31: #{tiny_model_forward.1} parent=1 // pred_check_branch
      %32 = sbr.rel (0) target = $region33
    $region32: #{tiny_model_forward.1} parent=1 // pred_region
      _
    $region33: #{tiny_model_forward.1} parent=1 // pred_fallthru
      _
    // Predicated region
    $region34: #{tiny_model_forward.1} parent=1 // pred_check
      _
    $region35: #{tiny_model_forward.1} parent=1 // pred_check_branch
      %34 = sbr.rel (0) target = $region37
    $region36: #{tiny_model_forward.1} parent=1 // pred_region
      _
    $region37: #{tiny_model_forward.1} parent=1 // pred_fallthru
      _
    // Predicated region
    $region38: #{tiny_model_forward.1} parent=1 // pred_check
      _
    $region39: #{tiny_model_forward.1} parent=1 // pred_check_branch
      %36 = sbr.rel (0) target = $region41
    $region40: #{tiny_model_forward.1} parent=1 // pred_region
      _
    $region41: #{tiny_model_forward.1} parent=1 // pred_fallthru
      _
    // Predicated region
    $region42: #{tiny_model_forward.1} parent=1 // pred_check
      _
    $region43: #{tiny_model_forward.1} parent=1 // pred_check_branch
      %38 = sbr.rel (0) target = $region45
    $region44: #{tiny_model_forward.1} parent=1 // pred_region
      _
    $region45: #{tiny_model_forward.1} parent=1 // pred_fallthru
      _
    %v39 = vld [vmem:[%s0] sm:$0xff]
    %v40 = vld [vmem:[%s0 + $0x8] sm:$0xff]
    %v41 = vld [vmem:[%s0 + $0x10] sm:$0xff]
    %v42 = vld [vmem:[%s0 + $0x18] sm:$0xff]
    %v43 = vld [vmem:[%s0 + $0x20] sm:$0xff]
    %v44 = vld [vmem:[%s0 + $0x28] sm:$0xff]
    %v45 = vld [vmem:[%s0 + $0x30] sm:$0xff]
    %v46 = vld [vmem:[%s0 + $0x38] sm:$0xff]
    %v47 = vld [vmem:[%s0 + $0x40] sm:$0xff]
    %v48 = vld [vmem:[%s0 + $0x48] sm:$0xff]
    %v49 = vld [vmem:[%s0 + $0x50] sm:$0xff]
    %v50 = vld [vmem:[%s0 + $0x58] sm:$0xff]
    %v51 = vld [vmem:[%s0 + $0x60] sm:$0xff]
    %v52 = vld [vmem:[%s0 + $0x68] sm:$0xff]
    %v53 = vld [vmem:[%s0 + $0x70] sm:$0xff]
    %v54 = vld [vmem:[%s0 + $0x78] sm:$0xff]
    %v55 = vld [vmem:[%s0 + $0x80] sm:$0xff]
    %v56 = vld [vmem:[%s0 + $0x88] sm:$0xff]
    %v57 = vld [vmem:[%s0 + $0x90] sm:$0xff]
    %v58 = vld [vmem:[%s0 + $0x98] sm:$0xff]
    %v59 = vld [vmem:[%s0 + $0xa0] sm:$0xff]
    %v60 = vld [vmem:[%s0 + $0xa8] sm:$0xff]
    %v61 = vld [vmem:[%s0 + $0xb0] sm:$0xff]
    %v62 = vld [vmem:[%s0 + $0xb8] sm:$0xff]
    %v63 = vld [vmem:[%s0 + $0xc0] sm:$0xff]
    %v64 = vld [vmem:[%s0 + $0xc8] sm:$0xff]
    %v65 = vld [vmem:[%s0 + $0xd0] sm:$0xff]
    %v66 = vld [vmem:[%s0 + $0xd8] sm:$0xff]
    %v67 = vld [vmem:[%s0 + $0xe0] sm:$0xff]
    %v68 = vld [vmem:[%s0 + $0xe8] sm:$0xff]
    %v69 = vld [vmem:[%s0 + $0xf0] sm:$0xff]
    %v70 = vld [vmem:[%s0 + $0xf8] sm:$0xff]
    %v71 = vld [vmem:[%s0 + $0x100] sm:$0xff]
    %v72 = vld [vmem:[%s0 + $0x108] sm:$0xff]
    %v73 = vld [vmem:[%s0 + $0x110] sm:$0xff]
    %v74 = vld [vmem:[%s0 + $0x118] sm:$0xff]
    %v75 = vld [vmem:[%s0 + $0x120] sm:$0xff]
    %v76 = vld [vmem:[%s0 + $0x128] sm:$0xff]
    %v77 = vld [vmem:[%s0 + $0x130] sm:$0xff]
    %v78 = vld [vmem:[%s0 + $0x138] sm:$0xff]
    %v79 = vld [vmem:[%s0 + $0x140] sm:$0xff]
    %v80 = vld [vmem:[%s0 + $0x148] sm:$0xff]
    %v81 = vld [vmem:[%s0 + $0x150] sm:$0xff]
    %v82 = vld [vmem:[%s0 + $0x158] sm:$0xff]
    %v83 = vld [vmem:[%s0 + $0x160] sm:$0xff]
    %v84 = vld [vmem:[%s0 + $0x168] sm:$0xff]
    %v85 = vld [vmem:[%s0 + $0x170] sm:$0xff]
    %v86 = vld [vmem:[%s0 + $0x178] sm:$0xff]
    %v87 = vld [vmem:[%s0 + $0x180] sm:$0xff]
    %v88 = vld [vmem:[%s0 + $0x188] sm:$0xff]
    %v89 = vld [vmem:[%s0 + $0x190] sm:$0xff]
    %v90 = vld [vmem:[%s0 + $0x198] sm:$0xff]
    %v91 = vld [vmem:[%s0 + $0x1a0] sm:$0xff]
    %v92 = vld [vmem:[%s0 + $0x1a8] sm:$0xff]
    %v93 = vld [vmem:[%s0 + $0x1b0] sm:$0xff]
    %v94 = vld [vmem:[%s0 + $0x1b8] sm:$0xff]
    %v95 = vld [vmem:[%s0 + $0x1c0] sm:$0xff]
    %v96 = vld [vmem:[%s0 + $0x1c8] sm:$0xff]
    %v97 = vld [vmem:[%s0 + $0x1d0] sm:$0xff]
    %v98 = vld [vmem:[%s0 + $0x1d8] sm:$0xff]
    %v99 = vld [vmem:[%s0 + $0x1e0] sm:$0xff]
    %v100 = vld [vmem:[%s0 + $0x1e8] sm:$0xff]
    %v101 = vld [vmem:[%s0 + $0x1f0] sm:$0xff]
    %v102 = vld [vmem:[%s0 + $0x1f8] sm:$0xff]
    %v103 = vld [vmem:[%s1] sm:$0xff]
    %v104 = vld [vmem:[%s1 + $0x8] sm:$0xff]
    %v105 = vld [vmem:[%s1 + $0x10] sm:$0xff]
    %v106 = vld [vmem:[%s1 + $0x18] sm:$0x7]
    %v107 = vld [vmem:[%s2] sm:$0x1]
    %v109 = vlaneseq
    %v110 = vshrl.u32 %v109, 7
    %v111 = vsub.s32 0, %v110
    %v112 = vrot.slane %v107, %v111
    %vm114 = vcmask 220160
    %v116 = vsel %vm114, %v39, 0
    %v119 = vsel %vm114, %v40, 0
    %v122 = vsel %vm114, %v41, 0
    %v125 = vsel %vm114, %v42, 0
    %v128 = vsel %vm114, %v43, 0
    %v131 = vsel %vm114, %v44, 0
    %v134 = vsel %vm114, %v45, 0
    %v137 = vsel %vm114, %v46, 0
    %v140 = vsel %vm114, %v47, 0
    %v143 = vsel %vm114, %v48, 0
    %v146 = vsel %vm114, %v49, 0
    %v149 = vsel %vm114, %v50, 0
    %v152 = vsel %vm114, %v51, 0
    %v155 = vsel %vm114, %v52, 0
    %v158 = vsel %vm114, %v53, 0
    %v161 = vsel %vm114, %v54, 0
    %v164 = vsel %vm114, %v55, 0
    %v167 = vsel %vm114, %v56, 0
    %v170 = vsel %vm114, %v57, 0
    %v173 = vsel %vm114, %v58, 0
    %v176 = vsel %vm114, %v59, 0
    %v179 = vsel %vm114, %v60, 0
    %v182 = vsel %vm114, %v61, 0
    %v185 = vsel %vm114, %v62, 0
    %v188 = vsel %vm114, %v63, 0
    %v191 = vsel %vm114, %v64, 0
    %v194 = vsel %vm114, %v65, 0
    %v197 = vsel %vm114, %v66, 0
    %v200 = vsel %vm114, %v67, 0
    %v203 = vsel %vm114, %v68, 0
    %v206 = vsel %vm114, %v69, 0
    %v209 = vsel %vm114, %v70, 0
    %v212 = vsel %vm114, %v71, 0
    %v215 = vsel %vm114, %v72, 0
    %v218 = vsel %vm114, %v73, 0
    %v221 = vsel %vm114, %v74, 0
    %v224 = vsel %vm114, %v75, 0
    %v227 = vsel %vm114, %v76, 0
    %v230 = vsel %vm114, %v77, 0
    %v233 = vsel %vm114, %v78, 0
    %v236 = vsel %vm114, %v79, 0
    %v239 = vsel %vm114, %v80, 0
    %v242 = vsel %vm114, %v81, 0
    %v245 = vsel %vm114, %v82, 0
    %v248 = vsel %vm114, %v83, 0
    %v251 = vsel %vm114, %v84, 0
    %v254 = vsel %vm114, %v85, 0
    %v257 = vsel %vm114, %v86, 0
    %v260 = vsel %vm114, %v87, 0
    %v263 = vsel %vm114, %v88, 0
    %v266 = vsel %vm114, %v89, 0
    %v269 = vsel %vm114, %v90, 0
    %v272 = vsel %vm114, %v91, 0
    %v275 = vsel %vm114, %v92, 0
    %v278 = vsel %vm114, %v93, 0
    %v281 = vsel %vm114, %v94, 0
    %v284 = vsel %vm114, %v95, 0
    %v287 = vsel %vm114, %v96, 0
    %v290 = vsel %vm114, %v97, 0
    %v293 = vsel %vm114, %v98, 0
    %v296 = vsel %vm114, %v99, 0
    %v299 = vsel %vm114, %v100, 0
    %v302 = vsel %vm114, %v101, 0
    %v305 = vsel %vm114, %v102, 0
    %vm307 = vcmask 1042432
    %v309 = vsel %vm307, %v106, 0
    %311 = vmatprep.subr.mxu0 0.0
    %312 = vmatpush1.msra.mxu0 %v103
    %313 = vmatprep.subr.mxu0 0.0
    %314 = vmatpush1.msra.mxu0 %v104
    %315 = vmatprep.subr.mxu0 0.0
    %316 = vmatpush1.msra.mxu0 %v105
    %317 = vmatprep.subr.mxu0 0.0
    %318 = vmatpush1.msra.mxu0 %v309
    %319 = vmatprep.subr.mxu0 0.0
    %320 = vmatpush1.msra.mxu0 0.0
    %321 = vmatprep.subr.mxu0 0.0
    %322 = vmatpush1.msra.mxu0 0.0
    %323 = vmatprep.subr.mxu0 0.0
    %324 = vmatpush1.msra.mxu0 0.0
    %325 = vmatprep.subr.mxu0 0.0
    %326 = vmatpush1.msra.mxu0 0.0
    %327 = vmatprep.subr.mxu0 0.0
    %328 = vmatpush1.msra.mxu0 0.0
    %329 = vmatprep.subr.mxu0 0.0
    %330 = vmatpush1.msra.mxu0 0.0
    %331 = vmatprep.subr.mxu0 0.0
    %332 = vmatpush1.msra.mxu0 0.0
    %333 = vmatprep.subr.mxu0 0.0
    %334 = vmatpush1.msra.mxu0 0.0
    %335 = vmatprep.subr.mxu0 0.0
    %336 = vmatpush1.msra.mxu0 0.0
    %337 = vmatprep.subr.mxu0 0.0
    %338 = vmatpush1.msra.mxu0 0.0
    %339 = vmatprep.subr.mxu0 0.0
    %340 = vmatpush1.msra.mxu0 0.0
    %341 = vmatprep.subr.mxu0 0.0
    %342 = vmatpush1.msra.mxu0 0.0
    %343 = vmatprep.subr.mxu0 0.0
    %344 = vmatpush1.msra.mxu0 0.0
    %345 = vmatprep.subr.mxu0 0.0
    %346 = vmatpush1.msra.mxu0 0.0
    %347 = vmatprep.subr.mxu0 0.0
    %348 = vmatpush1.msra.mxu0 0.0
    %349 = vmatprep.subr.mxu0 0.0
    %350 = vmatpush1.msra.mxu0 0.0
    %351 = vmatprep.subr.mxu0 0.0
    %352 = vmatpush1.msra.mxu0 0.0
    %353 = vmatprep.subr.mxu0 0.0
    %354 = vmatpush1.msra.mxu0 0.0
    %355 = vmatprep.subr.mxu0 0.0
    %356 = vmatpush1.msra.mxu0 0.0
    %357 = vmatprep.subr.mxu0 0.0
    %358 = vmatpush1.msra.mxu0 0.0
    %359 = vmatprep.subr.mxu0 0.0
    %360 = vmatpush1.msra.mxu0 0.0
    %361 = vmatprep.subr.mxu0 0.0
    %362 = vmatpush1.msra.mxu0 0.0
    %363 = vmatprep.subr.mxu0 0.0
    %364 = vmatpush1.msra.mxu0 0.0
    %365 = vmatprep.subr.mxu0 0.0
    %366 = vmatpush1.msra.mxu0 0.0
    %367 = vmatprep.subr.mxu0 0.0
    %368 = vmatpush1.msra.mxu0 0.0
    %369 = vmatprep.subr.mxu0 0.0
    %370 = vmatpush1.msra.mxu0 0.0
    %371 = vmatprep.subr.mxu0 0.0
    %372 = vmatpush1.msra.mxu0 0.0
    %373 = vmatprep.subr.mxu0 0.0
    %374 = vmatpush1.msra.mxu0 0.0
    %375 = vmatprep.mubr.f32.mxu0 0.0
    %376 = vmatmul.mubr.f32.gmra.mrb[0].mxu0 %v116
    %v377 = vpop.f32.mrb[0].mxu0
    %v378 = vadd.f32 %v112, %v377
    %v379 = vpop.f32.mrb[0].mxu0
    %380 = vmatprep.mubr.f32.mxu0 0.0
    %381 = vmatmul.mubr.f32.gmra.mrb[0].mxu0 %v119
    %v382 = vpop.f32.mrb[0].mxu0
    %v383 = vadd.f32 %v112, %v382
    %v384 = vpop.f32.mrb[0].mxu0
    %385 = vmatprep.mubr.f32.mxu0 0.0
    %386 = vmatmul.mubr.f32.gmra.mrb[0].mxu0 %v122
    %v387 = vpop.f32.mrb[0].mxu0
    %v388 = vadd.f32 %v112, %v387
    %v389 = vpop.f32.mrb[0].mxu0
    %390 = vmatprep.mubr.f32.mxu0 0.0
    %391 = vmatmul.mubr.f32.gmra.mrb[0].mxu0 %v125
    %v392 = vpop.f32.mrb[0].mxu0
    %v393 = vadd.f32 %v112, %v392
    %v394 = vpop.f32.mrb[0].mxu0
    %395 = vmatprep.mubr.f32.mxu0 0.0
    %396 = vmatmul.mubr.f32.gmra.mrb[0].mxu0 %v128
    %v397 = vpop.f32.mrb[0].mxu0
    %v398 = vadd.f32 %v112, %v397
    %v399 = vpop.f32.mrb[0].mxu0
    %400 = vmatprep.mubr.f32.mxu0 0.0
    %401 = vmatmul.mubr.f32.gmra.mrb[0].mxu0 %v131
    %v402 = vpop.f32.mrb[0].mxu0
    %v403 = vadd.f32 %v112, %v402
    %v404 = vpop.f32.mrb[0].mxu0
    %405 = vmatprep.mubr.f32.mxu0 0.0
    %406 = vmatmul.mubr.f32.gmra.mrb[0].mxu0 %v134
    %v407 = vpop.f32.mrb[0].mxu0
    %v408 = vadd.f32 %v112, %v407
    %v409 = vpop.f32.mrb[0].mxu0
    %410 = vmatprep.mubr.f32.mxu0 0.0
    %411 = vmatmul.mubr.f32.gmra.mrb[0].mxu0 %v137
    %v412 = vpop.f32.mrb[0].mxu0
    %v413 = vadd.f32 %v112, %v412
    %v414 = vpop.f32.mrb[0].mxu0
    %415 = vmatprep.mubr.f32.mxu0 0.0
    %416 = vmatmul.mubr.f32.gmra.mrb[0].mxu0 %v140
    %v417 = vpop.f32.mrb[0].mxu0
    %v418 = vadd.f32 %v112, %v417
    %v419 = vpop.f32.mrb[0].mxu0
    %420 = vmatprep.mubr.f32.mxu0 0.0
    %421 = vmatmul.mubr.f32.gmra.mrb[0].mxu0 %v143
    %v422 = vpop.f32.mrb[0].mxu0
    %v423 = vadd.f32 %v112, %v422
    %v424 = vpop.f32.mrb[0].mxu0
    %425 = vmatprep.mubr.f32.mxu0 0.0
    %426 = vmatmul.mubr.f32.gmra.mrb[0].mxu0 %v146
    %v427 = vpop.f32.mrb[0].mxu0
    %v428 = vadd.f32 %v112, %v427
    %v429 = vpop.f32.mrb[0].mxu0
    %430 = vmatprep.mubr.f32.mxu0 0.0
    %431 = vmatmul.mubr.f32.gmra.mrb[0].mxu0 %v149
    %v432 = vpop.f32.mrb[0].mxu0
    %v433 = vadd.f32 %v112, %v432
    %v434 = vpop.f32.mrb[0].mxu0
    %435 = vmatprep.mubr.f32.mxu0 0.0
    %436 = vmatmul.mubr.f32.gmra.mrb[0].mxu0 %v152
    %v437 = vpop.f32.mrb[0].mxu0
    %v438 = vadd.f32 %v112, %v437
    %v439 = vpop.f32.mrb[0].mxu0
    %440 = vmatprep.mubr.f32.mxu0 0.0
    %441 = vmatmul.mubr.f32.gmra.mrb[0].mxu0 %v155
    %v442 = vpop.f32.mrb[0].mxu0
    %v443 = vadd.f32 %v112, %v442
    %v444 = vpop.f32.mrb[0].mxu0
    %445 = vmatprep.mubr.f32.mxu0 0.0
    %446 = vmatmul.mubr.f32.gmra.mrb[0].mxu0 %v158
    %v447 = vpop.f32.mrb[0].mxu0
    %v448 = vadd.f32 %v112, %v447
    %v449 = vpop.f32.mrb[0].mxu0
    %450 = vmatprep.mubr.f32.mxu0 0.0
    %451 = vmatmul.mubr.f32.gmra.mrb[0].mxu0 %v161
    %v452 = vpop.f32.mrb[0].mxu0
    %v453 = vadd.f32 %v112, %v452
    %v454 = vpop.f32.mrb[0].mxu0
    %455 = vmatprep.mubr.f32.mxu0 0.0
    %456 = vmatmul.mubr.f32.gmra.mrb[0].mxu0 %v164
    %v457 = vpop.f32.mrb[0].mxu0
    %v458 = vadd.f32 %v112, %v457
    %v459 = vpop.f32.mrb[0].mxu0
    %460 = vmatprep.mubr.f32.mxu0 0.0
    %461 = vmatmul.mubr.f32.gmra.mrb[0].mxu0 %v167
    %v462 = vpop.f32.mrb[0].mxu0
    %v463 = vadd.f32 %v112, %v462
    %v464 = vpop.f32.mrb[0].mxu0
    %465 = vmatprep.mubr.f32.mxu0 0.0
    %466 = vmatmul.mubr.f32.gmra.mrb[0].mxu0 %v170
    %v467 = vpop.f32.mrb[0].mxu0
    %v468 = vadd.f32 %v112, %v467
    %v469 = vpop.f32.mrb[0].mxu0
    %470 = vmatprep.mubr.f32.mxu0 0.0
    %471 = vmatmul.mubr.f32.gmra.mrb[0].mxu0 %v173
    %v472 = vpop.f32.mrb[0].mxu0
    %v473 = vadd.f32 %v112, %v472
    %v474 = vpop.f32.mrb[0].mxu0
    %475 = vmatprep.mubr.f32.mxu0 0.0
    %476 = vmatmul.mubr.f32.gmra.mrb[0].mxu0 %v176
    %v477 = vpop.f32.mrb[0].mxu0
    %v478 = vadd.f32 %v112, %v477
    %v479 = vpop.f32.mrb[0].mxu0
    %480 = vmatprep.mubr.f32.mxu0 0.0
    %481 = vmatmul.mubr.f32.gmra.mrb[0].mxu0 %v179
    %v482 = vpop.f32.mrb[0].mxu0
    %v483 = vadd.f32 %v112, %v482
    %v484 = vpop.f32.mrb[0].mxu0
    %485 = vmatprep.mubr.f32.mxu0 0.0
    %486 = vmatmul.mubr.f32.gmra.mrb[0].mxu0 %v182
    %v487 = vpop.f32.mrb[0].mxu0
    %v488 = vadd.f32 %v112, %v487
    %v489 = vpop.f32.mrb[0].mxu0
    %490 = vmatprep.mubr.f32.mxu0 0.0
    %491 = vmatmul.mubr.f32.gmra.mrb[0].mxu0 %v185
    %v492 = vpop.f32.mrb[0].mxu0
    %v493 = vadd.f32 %v112, %v492
    %v494 = vpop.f32.mrb[0].mxu0
    %495 = vmatprep.mubr.f32.mxu0 0.0
    %496 = vmatmul.mubr.f32.gmra.mrb[0].mxu0 %v188
    %v497 = vpop.f32.mrb[0].mxu0
    %v498 = vadd.f32 %v112, %v497
    %v499 = vpop.f32.mrb[0].mxu0
    %500 = vmatprep.mubr.f32.mxu0 0.0
    %501 = vmatmul.mubr.f32.gmra.mrb[0].mxu0 %v191
    %v502 = vpop.f32.mrb[0].mxu0
    %v503 = vadd.f32 %v112, %v502
    %v504 = vpop.f32.mrb[0].mxu0
    %505 = vmatprep.mubr.f32.mxu0 0.0
    %506 = vmatmul.mubr.f32.gmra.mrb[0].mxu0 %v194
    %v507 = vpop.f32.mrb[0].mxu0
    %v508 = vadd.f32 %v112, %v507
    %v509 = vpop.f32.mrb[0].mxu0
    %510 = vmatprep.mubr.f32.mxu0 0.0
    %511 = vmatmul.mubr.f32.gmra.mrb[0].mxu0 %v197
    %v512 = vpop.f32.mrb[0].mxu0
    %v513 = vadd.f32 %v112, %v512
    %v514 = vpop.f32.mrb[0].mxu0
    %515 = vmatprep.mubr.f32.mxu0 0.0
    %516 = vmatmul.mubr.f32.gmra.mrb[0].mxu0 %v200
    %v517 = vpop.f32.mrb[0].mxu0
    %v518 = vadd.f32 %v112, %v517
    %v519 = vpop.f32.mrb[0].mxu0
    %520 = vmatprep.mubr.f32.mxu0 0.0
    %521 = vmatmul.mubr.f32.gmra.mrb[0].mxu0 %v203
    %v522 = vpop.f32.mrb[0].mxu0
    %v523 = vadd.f32 %v112, %v522
    %v524 = vpop.f32.mrb[0].mxu0
    %525 = vmatprep.mubr.f32.mxu0 0.0
    %526 = vmatmul.mubr.f32.gmra.mrb[0].mxu0 %v206
    %v527 = vpop.f32.mrb[0].mxu0
    %v528 = vadd.f32 %v112, %v527
    %v529 = vpop.f32.mrb[0].mxu0
    %530 = vmatprep.mubr.f32.mxu0 0.0
    %531 = vmatmul.mubr.f32.gmra.mrb[0].mxu0 %v209
    %v532 = vpop.f32.mrb[0].mxu0
    %v533 = vadd.f32 %v112, %v532
    %v534 = vpop.f32.mrb[0].mxu0
    %535 = vmatprep.mubr.f32.mxu0 0.0
    %536 = vmatmul.mubr.f32.gmra.mrb[0].mxu0 %v212
    %v537 = vpop.f32.mrb[0].mxu0
    %v538 = vadd.f32 %v112, %v537
    %v539 = vpop.f32.mrb[0].mxu0
    %540 = vmatprep.mubr.f32.mxu0 0.0
    %541 = vmatmul.mubr.f32.gmra.mrb[0].mxu0 %v215
    %v542 = vpop.f32.mrb[0].mxu0
    %v543 = vadd.f32 %v112, %v542
    %v544 = vpop.f32.mrb[0].mxu0
    %545 = vmatprep.mubr.f32.mxu0 0.0
    %546 = vmatmul.mubr.f32.gmra.mrb[0].mxu0 %v218
    %v547 = vpop.f32.mrb[0].mxu0
    %v548 = vadd.f32 %v112, %v547
    %v549 = vpop.f32.mrb[0].mxu0
    %550 = vmatprep.mubr.f32.mxu0 0.0
    %551 = vmatmul.mubr.f32.gmra.mrb[0].mxu0 %v221
    %v552 = vpop.f32.mrb[0].mxu0
    %v553 = vadd.f32 %v112, %v552
    %v554 = vpop.f32.mrb[0].mxu0
    %555 = vmatprep.mubr.f32.mxu0 0.0
    %556 = vmatmul.mubr.f32.gmra.mrb[0].mxu0 %v224
    %v557 = vpop.f32.mrb[0].mxu0
    %v558 = vadd.f32 %v112, %v557
    %v559 = vpop.f32.mrb[0].mxu0
    %560 = vmatprep.mubr.f32.mxu0 0.0
    %561 = vmatmul.mubr.f32.gmra.mrb[0].mxu0 %v227
    %v562 = vpop.f32.mrb[0].mxu0
    %v563 = vadd.f32 %v112, %v562
    %v564 = vpop.f32.mrb[0].mxu0
    %565 = vmatprep.mubr.f32.mxu0 0.0
    %566 = vmatmul.mubr.f32.gmra.mrb[0].mxu0 %v230
    %v567 = vpop.f32.mrb[0].mxu0
    %v568 = vadd.f32 %v112, %v567
    %v569 = vpop.f32.mrb[0].mxu0
    %570 = vmatprep.mubr.f32.mxu0 0.0
    %571 = vmatmul.mubr.f32.gmra.mrb[0].mxu0 %v233
    %v572 = vpop.f32.mrb[0].mxu0
    %v573 = vadd.f32 %v112, %v572
    %v574 = vpop.f32.mrb[0].mxu0
    %575 = vmatprep.mubr.f32.mxu0 0.0
    %576 = vmatmul.mubr.f32.gmra.mrb[0].mxu0 %v236
    %v577 = vpop.f32.mrb[0].mxu0
    %v578 = vadd.f32 %v112, %v577
    %v579 = vpop.f32.mrb[0].mxu0
    %580 = vmatprep.mubr.f32.mxu0 0.0
    %581 = vmatmul.mubr.f32.gmra.mrb[0].mxu0 %v239
    %v582 = vpop.f32.mrb[0].mxu0
    %v583 = vadd.f32 %v112, %v582
    %v584 = vpop.f32.mrb[0].mxu0
    %585 = vmatprep.mubr.f32.mxu0 0.0
    %586 = vmatmul.mubr.f32.gmra.mrb[0].mxu0 %v242
    %v587 = vpop.f32.mrb[0].mxu0
    %v588 = vadd.f32 %v112, %v587
    %v589 = vpop.f32.mrb[0].mxu0
    %590 = vmatprep.mubr.f32.mxu0 0.0
    %591 = vmatmul.mubr.f32.gmra.mrb[0].mxu0 %v245
    %v592 = vpop.f32.mrb[0].mxu0
    %v593 = vadd.f32 %v112, %v592
    %v594 = vpop.f32.mrb[0].mxu0
    %595 = vmatprep.mubr.f32.mxu0 0.0
    %596 = vmatmul.mubr.f32.gmra.mrb[0].mxu0 %v248
    %v597 = vpop.f32.mrb[0].mxu0
    %v598 = vadd.f32 %v112, %v597
    %v599 = vpop.f32.mrb[0].mxu0
    %600 = vmatprep.mubr.f32.mxu0 0.0
    %601 = vmatmul.mubr.f32.gmra.mrb[0].mxu0 %v251
    %v602 = vpop.f32.mrb[0].mxu0
    %v603 = vadd.f32 %v112, %v602
    %v604 = vpop.f32.mrb[0].mxu0
    %605 = vmatprep.mubr.f32.mxu0 0.0
    %606 = vmatmul.mubr.f32.gmra.mrb[0].mxu0 %v254
    %v607 = vpop.f32.mrb[0].mxu0
    %v608 = vadd.f32 %v112, %v607
    %v609 = vpop.f32.mrb[0].mxu0
    %610 = vmatprep.mubr.f32.mxu0 0.0
    %611 = vmatmul.mubr.f32.gmra.mrb[0].mxu0 %v257
    %v612 = vpop.f32.mrb[0].mxu0
    %v613 = vadd.f32 %v112, %v612
    %v614 = vpop.f32.mrb[0].mxu0
    %615 = vmatprep.mubr.f32.mxu0 0.0
    %616 = vmatmul.mubr.f32.gmra.mrb[0].mxu0 %v260
    %v617 = vpop.f32.mrb[0].mxu0
    %v618 = vadd.f32 %v112, %v617
    %v619 = vpop.f32.mrb[0].mxu0
    %620 = vmatprep.mubr.f32.mxu0 0.0
    %621 = vmatmul.mubr.f32.gmra.mrb[0].mxu0 %v263
    %v622 = vpop.f32.mrb[0].mxu0
    %v623 = vadd.f32 %v112, %v622
    %v624 = vpop.f32.mrb[0].mxu0
    %625 = vmatprep.mubr.f32.mxu0 0.0
    %626 = vmatmul.mubr.f32.gmra.mrb[0].mxu0 %v266
    %v627 = vpop.f32.mrb[0].mxu0
    %v628 = vadd.f32 %v112, %v627
    %v629 = vpop.f32.mrb[0].mxu0
    %630 = vmatprep.mubr.f32.mxu0 0.0
    %631 = vmatmul.mubr.f32.gmra.mrb[0].mxu0 %v269
    %v632 = vpop.f32.mrb[0].mxu0
    %v633 = vadd.f32 %v112, %v632
    %v634 = vpop.f32.mrb[0].mxu0
    %635 = vmatprep.mubr.f32.mxu0 0.0
    %636 = vmatmul.mubr.f32.gmra.mrb[0].mxu0 %v272
    %v637 = vpop.f32.mrb[0].mxu0
    %v638 = vadd.f32 %v112, %v637
    %v639 = vpop.f32.mrb[0].mxu0
    %640 = vmatprep.mubr.f32.mxu0 0.0
    %641 = vmatmul.mubr.f32.gmra.mrb[0].mxu0 %v275
    %v642 = vpop.f32.mrb[0].mxu0
    %v643 = vadd.f32 %v112, %v642
    %v644 = vpop.f32.mrb[0].mxu0
    %645 = vmatprep.mubr.f32.mxu0 0.0
    %646 = vmatmul.mubr.f32.gmra.mrb[0].mxu0 %v278
    %v647 = vpop.f32.mrb[0].mxu0
    %v648 = vadd.f32 %v112, %v647
    %v649 = vpop.f32.mrb[0].mxu0
    %650 = vmatprep.mubr.f32.mxu0 0.0
    %651 = vmatmul.mubr.f32.gmra.mrb[0].mxu0 %v281
    %v652 = vpop.f32.mrb[0].mxu0
    %v653 = vadd.f32 %v112, %v652
    %v654 = vpop.f32.mrb[0].mxu0
    %655 = vmatprep.mubr.f32.mxu0 0.0
    %656 = vmatmul.mubr.f32.gmra.mrb[0].mxu0 %v284
    %v657 = vpop.f32.mrb[0].mxu0
    %v658 = vadd.f32 %v112, %v657
    %v659 = vpop.f32.mrb[0].mxu0
    %660 = vmatprep.mubr.f32.mxu0 0.0
    %661 = vmatmul.mubr.f32.gmra.mrb[0].mxu0 %v287
    %v662 = vpop.f32.mrb[0].mxu0
    %v663 = vadd.f32 %v112, %v662
    %v664 = vpop.f32.mrb[0].mxu0
    %665 = vmatprep.mubr.f32.mxu0 0.0
    %666 = vmatmul.mubr.f32.gmra.mrb[0].mxu0 %v290
    %v667 = vpop.f32.mrb[0].mxu0
    %v668 = vadd.f32 %v112, %v667
    %v669 = vpop.f32.mrb[0].mxu0
    %670 = vmatprep.mubr.f32.mxu0 0.0
    %671 = vmatmul.mubr.f32.gmra.mrb[0].mxu0 %v293
    %v672 = vpop.f32.mrb[0].mxu0
    %v673 = vadd.f32 %v112, %v672
    %v674 = vpop.f32.mrb[0].mxu0
    %675 = vmatprep.mubr.f32.mxu0 0.0
    %676 = vmatmul.mubr.f32.gmra.mrb[0].mxu0 %v296
    %v677 = vpop.f32.mrb[0].mxu0
    %v678 = vadd.f32 %v112, %v677
    %v679 = vpop.f32.mrb[0].mxu0
    %680 = vmatprep.mubr.f32.mxu0 0.0
    %681 = vmatmul.mubr.f32.gmra.mrb[0].mxu0 %v299
    %v682 = vpop.f32.mrb[0].mxu0
    %v683 = vadd.f32 %v112, %v682
    %v684 = vpop.f32.mrb[0].mxu0
    %685 = vmatprep.mubr.f32.mxu0 0.0
    %686 = vmatmul.mubr.f32.gmra.mrb[0].mxu0 %v302
    %v687 = vpop.f32.mrb[0].mxu0
    %v688 = vadd.f32 %v112, %v687
    %v689 = vpop.f32.mrb[0].mxu0
    %690 = vmatprep.mubr.f32.mxu0 0.0
    %691 = vmatmul.mubr.f32.gmra.mrb[0].mxu0 %v305
    %v692 = vpop.f32.mrb[0].mxu0
    %v693 = vadd.f32 %v112, %v692
    %v694 = vpop.f32.mrb[0].mxu0
    %695 = vdwg.mxu0
    %v696 = vmax.f32 %v378, 0.0
    %v697 = vmax.f32 %v383, 0.0
    %v698 = vmax.f32 %v388, 0.0
    %v699 = vmax.f32 %v393, 0.0
    %v700 = vmax.f32 %v398, 0.0
    %v701 = vmax.f32 %v403, 0.0
    %v702 = vmax.f32 %v408, 0.0
    %v703 = vmax.f32 %v413, 0.0
    %v704 = vmax.f32 %v418, 0.0
    %v705 = vmax.f32 %v423, 0.0
    %v706 = vmax.f32 %v428, 0.0
    %v707 = vmax.f32 %v433, 0.0
    %v708 = vmax.f32 %v438, 0.0
    %v709 = vmax.f32 %v443, 0.0
    %v710 = vmax.f32 %v448, 0.0
    %v711 = vmax.f32 %v453, 0.0
    %v712 = vmax.f32 %v458, 0.0
    %v713 = vmax.f32 %v463, 0.0
    %v714 = vmax.f32 %v468, 0.0
    %v715 = vmax.f32 %v473, 0.0
    %v716 = vmax.f32 %v478, 0.0
    %v717 = vmax.f32 %v483, 0.0
    %v718 = vmax.f32 %v488, 0.0
    %v719 = vmax.f32 %v493, 0.0
    %v720 = vmax.f32 %v498, 0.0
    %v721 = vmax.f32 %v503, 0.0
    %v722 = vmax.f32 %v508, 0.0
    %v723 = vmax.f32 %v513, 0.0
    %v724 = vmax.f32 %v518, 0.0
    %v725 = vmax.f32 %v523, 0.0
    %v726 = vmax.f32 %v528, 0.0
    %v727 = vmax.f32 %v533, 0.0
    %v728 = vmax.f32 %v538, 0.0
    %v729 = vmax.f32 %v543, 0.0
    %v730 = vmax.f32 %v548, 0.0
    %v731 = vmax.f32 %v553, 0.0
    %v732 = vmax.f32 %v558, 0.0
    %v733 = vmax.f32 %v563, 0.0
    %v734 = vmax.f32 %v568, 0.0
    %v735 = vmax.f32 %v573, 0.0
    %v736 = vmax.f32 %v578, 0.0
    %v737 = vmax.f32 %v583, 0.0
    %v738 = vmax.f32 %v588, 0.0
    %v739 = vmax.f32 %v593, 0.0
    %v740 = vmax.f32 %v598, 0.0
    %v741 = vmax.f32 %v603, 0.0
    %v742 = vmax.f32 %v608, 0.0
    %v743 = vmax.f32 %v613, 0.0
    %v744 = vmax.f32 %v618, 0.0
    %v745 = vmax.f32 %v623, 0.0
    %v746 = vmax.f32 %v628, 0.0
    %v747 = vmax.f32 %v633, 0.0
    %v748 = vmax.f32 %v638, 0.0
    %v749 = vmax.f32 %v643, 0.0
    %v750 = vmax.f32 %v648, 0.0
    %v751 = vmax.f32 %v653, 0.0
    %v752 = vmax.f32 %v658, 0.0
    %v753 = vmax.f32 %v663, 0.0
    %v754 = vmax.f32 %v668, 0.0
    %v755 = vmax.f32 %v673, 0.0
    %v756 = vmax.f32 %v678, 0.0
    %v757 = vmax.f32 %v683, 0.0
    %v758 = vmax.f32 %v688, 0.0
    %v759 = vmax.f32 %v693, 0.0
    %vm760 = vcmask 130048
    %v761 = vsel %vm760, %v696, 0.0
    %v762 = vsel %vm760, %v697, 0.0
    %v763 = vadd.f32 %v761, %v762
    %v764 = vsel %vm760, %v698, 0.0
    %v765 = vadd.f32 %v763, %v764
    %v766 = vsel %vm760, %v699, 0.0
    %v767 = vadd.f32 %v765, %v766
    %v768 = vsel %vm760, %v700, 0.0
    %v769 = vadd.f32 %v767, %v768
    %v770 = vsel %vm760, %v701, 0.0
    %v771 = vadd.f32 %v769, %v770
    %v772 = vsel %vm760, %v702, 0.0
    %v773 = vadd.f32 %v771, %v772
    %v774 = vsel %vm760, %v703, 0.0
    %v775 = vadd.f32 %v773, %v774
    %v776 = vsel %vm760, %v704, 0.0
    %v777 = vadd.f32 %v775, %v776
    %v778 = vsel %vm760, %v705, 0.0
    %v779 = vadd.f32 %v777, %v778
    %v780 = vsel %vm760, %v706, 0.0
    %v781 = vadd.f32 %v779, %v780
    %v782 = vsel %vm760, %v707, 0.0
    %v783 = vadd.f32 %v781, %v782
    %v784 = vsel %vm760, %v708, 0.0
    %v785 = vadd.f32 %v783, %v784
    %v786 = vsel %vm760, %v709, 0.0
    %v787 = vadd.f32 %v785, %v786
    %v788 = vsel %vm760, %v710, 0.0
    %v789 = vadd.f32 %v787, %v788
    %v790 = vsel %vm760, %v711, 0.0
    %v791 = vadd.f32 %v789, %v790
    %v792 = vsel %vm760, %v712, 0.0
    %v793 = vadd.f32 %v791, %v792
    %v794 = vsel %vm760, %v713, 0.0
    %v795 = vadd.f32 %v793, %v794
    %v796 = vsel %vm760, %v714, 0.0
    %v797 = vadd.f32 %v795, %v796
    %v798 = vsel %vm760, %v715, 0.0
    %v799 = vadd.f32 %v797, %v798
    %v800 = vsel %vm760, %v716, 0.0
    %v801 = vadd.f32 %v799, %v800
    %v802 = vsel %vm760, %v717, 0.0
    %v803 = vadd.f32 %v801, %v802
    %v804 = vsel %vm760, %v718, 0.0
    %v805 = vadd.f32 %v803, %v804
    %v806 = vsel %vm760, %v719, 0.0
    %v807 = vadd.f32 %v805, %v806
    %v808 = vsel %vm760, %v720, 0.0
    %v809 = vadd.f32 %v807, %v808
    %v810 = vsel %vm760, %v721, 0.0
    %v811 = vadd.f32 %v809, %v810
    %v812 = vsel %vm760, %v722, 0.0
    %v813 = vadd.f32 %v811, %v812
    %v814 = vsel %vm760, %v723, 0.0
    %v815 = vadd.f32 %v813, %v814
    %v816 = vsel %vm760, %v724, 0.0
    %v817 = vadd.f32 %v815, %v816
    %v818 = vsel %vm760, %v725, 0.0
    %v819 = vadd.f32 %v817, %v818
    %v820 = vsel %vm760, %v726, 0.0
    %v821 = vadd.f32 %v819, %v820
    %v822 = vsel %vm760, %v727, 0.0
    %v823 = vadd.f32 %v821, %v822
    %v824 = vsel %vm760, %v728, 0.0
    %v825 = vadd.f32 %v823, %v824
    %v826 = vsel %vm760, %v729, 0.0
    %v827 = vadd.f32 %v825, %v826
    %v828 = vsel %vm760, %v730, 0.0
    %v829 = vadd.f32 %v827, %v828
    %v830 = vsel %vm760, %v731, 0.0
    %v831 = vadd.f32 %v829, %v830
    %v832 = vsel %vm760, %v732, 0.0
    %v833 = vadd.f32 %v831, %v832
    %v834 = vsel %vm760, %v733, 0.0
    %v835 = vadd.f32 %v833, %v834
    %v836 = vsel %vm760, %v734, 0.0
    %v837 = vadd.f32 %v835, %v836
    %v838 = vsel %vm760, %v735, 0.0
    %v839 = vadd.f32 %v837, %v838
    %v840 = vsel %vm760, %v736, 0.0
    %v841 = vadd.f32 %v839, %v840
    %v842 = vsel %vm760, %v737, 0.0
    %v843 = vadd.f32 %v841, %v842
    %v844 = vsel %vm760, %v738, 0.0
    %v845 = vadd.f32 %v843, %v844
    %v846 = vsel %vm760, %v739, 0.0
    %v847 = vadd.f32 %v845, %v846
    %v848 = vsel %vm760, %v740, 0.0
    %v849 = vadd.f32 %v847, %v848
    %v850 = vsel %vm760, %v741, 0.0
    %v851 = vadd.f32 %v849, %v850
    %v852 = vsel %vm760, %v742, 0.0
    %v853 = vadd.f32 %v851, %v852
    %v854 = vsel %vm760, %v743, 0.0
    %v855 = vadd.f32 %v853, %v854
    %v856 = vsel %vm760, %v744, 0.0
    %v857 = vadd.f32 %v855, %v856
    %v858 = vsel %vm760, %v745, 0.0
    %v859 = vadd.f32 %v857, %v858
    %v860 = vsel %vm760, %v746, 0.0
    %v861 = vadd.f32 %v859, %v860
    %v862 = vsel %vm760, %v747, 0.0
    %v863 = vadd.f32 %v861, %v862
    %v864 = vsel %vm760, %v748, 0.0
    %v865 = vadd.f32 %v863, %v864
    %v866 = vsel %vm760, %v749, 0.0
    %v867 = vadd.f32 %v865, %v866
    %v868 = vsel %vm760, %v750, 0.0
    %v869 = vadd.f32 %v867, %v868
    %v870 = vsel %vm760, %v751, 0.0
    %v871 = vadd.f32 %v869, %v870
    %v872 = vsel %vm760, %v752, 0.0
    %v873 = vadd.f32 %v871, %v872
    %v874 = vsel %vm760, %v753, 0.0
    %v875 = vadd.f32 %v873, %v874
    %v876 = vsel %vm760, %v754, 0.0
    %v877 = vadd.f32 %v875, %v876
    %v878 = vsel %vm760, %v755, 0.0
    %v879 = vadd.f32 %v877, %v878
    %v880 = vsel %vm760, %v756, 0.0
    %v881 = vadd.f32 %v879, %v880
    %v882 = vsel %vm760, %v757, 0.0
    %v883 = vadd.f32 %v881, %v882
    %v884 = vsel %vm760, %v758, 0.0
    %v885 = vadd.f32 %v883, %v884
    %v886 = vsel %vm760, %v759, 0.0
    %v887 = vadd.f32 %v885, %v886
    %v888 = vrot.slane %v887, 4
    %v889 = vadd.f32 %v887, %v888
    %v890 = vrot.slane %v889, 2
    %v891 = vadd.f32 %v889, %v890
    %v892 = vrot.slane %v891, 1
    %v893 = vadd.f32 %v891, %v892
    %v894 = vrcp.pop 512.0
    %v895 = vmul.f32 %v893, %v894
    %v896 = vsub.f32 %v696, %v895
    %v897 = vsub.f32 %v697, %v895
    %v898 = vsub.f32 %v698, %v895
    %v899 = vsub.f32 %v699, %v895
    %v900 = vsub.f32 %v700, %v895
    %v901 = vsub.f32 %v701, %v895
    %v902 = vsub.f32 %v702, %v895
    %v903 = vsub.f32 %v703, %v895
    %v904 = vsub.f32 %v704, %v895
    %v905 = vsub.f32 %v705, %v895
    %v906 = vsub.f32 %v706, %v895
    %v907 = vsub.f32 %v707, %v895
    %v908 = vsub.f32 %v708, %v895
    %v909 = vsub.f32 %v709, %v895
    %v910 = vsub.f32 %v710, %v895
    %v911 = vsub.f32 %v711, %v895
    %v912 = vsub.f32 %v712, %v895
    %v913 = vsub.f32 %v713, %v895
    %v914 = vsub.f32 %v714, %v895
    %v915 = vsub.f32 %v715, %v895
    %v916 = vsub.f32 %v716, %v895
    %v917 = vsub.f32 %v717, %v895
    %v918 = vsub.f32 %v718, %v895
    %v919 = vsub.f32 %v719, %v895
    %v920 = vsub.f32 %v720, %v895
    %v921 = vsub.f32 %v721, %v895
    %v922 = vsub.f32 %v722, %v895
    %v923 = vsub.f32 %v723, %v895
    %v924 = vsub.f32 %v724, %v895
    %v925 = vsub.f32 %v725, %v895
    %v926 = vsub.f32 %v726, %v895
    %v927 = vsub.f32 %v727, %v895
    %v928 = vsub.f32 %v728, %v895
    %v929 = vsub.f32 %v729, %v895
    %v930 = vsub.f32 %v730, %v895
    %v931 = vsub.f32 %v731, %v895
    %v932 = vsub.f32 %v732, %v895
    %v933 = vsub.f32 %v733, %v895
    %v934 = vsub.f32 %v734, %v895
    %v935 = vsub.f32 %v735, %v895
    %v936 = vsub.f32 %v736, %v895
    %v937 = vsub.f32 %v737, %v895
    %v938 = vsub.f32 %v738, %v895
    %v939 = vsub.f32 %v739, %v895
    %v940 = vsub.f32 %v740, %v895
    %v941 = vsub.f32 %v741, %v895
    %v942 = vsub.f32 %v742, %v895
    %v943 = vsub.f32 %v743, %v895
    %v944 = vsub.f32 %v744, %v895
    %v945 = vsub.f32 %v745, %v895
    %v946 = vsub.f32 %v746, %v895
    %v947 = vsub.f32 %v747, %v895
    %v948 = vsub.f32 %v748, %v895
    %v949 = vsub.f32 %v749, %v895
    %v950 = vsub.f32 %v750, %v895
    %v951 = vsub.f32 %v751, %v895
    %v952 = vsub.f32 %v752, %v895
    %v953 = vsub.f32 %v753, %v895
    %v954 = vsub.f32 %v754, %v895
    %v955 = vsub.f32 %v755, %v895
    %v956 = vsub.f32 %v756, %v895
    %v957 = vsub.f32 %v757, %v895
    %v958 = vsub.f32 %v758, %v895
    %v959 = vsub.f32 %v759, %v895
    %v960 = vmul.f32 %v896, %v896
    %v961 = vmul.f32 %v897, %v897
    %v962 = vmul.f32 %v898, %v898
    %v963 = vmul.f32 %v899, %v899
    %v964 = vmul.f32 %v900, %v900
    %v965 = vmul.f32 %v901, %v901
    %v966 = vmul.f32 %v902, %v902
    %v967 = vmul.f32 %v903, %v903
    %v968 = vmul.f32 %v904, %v904
    %v969 = vmul.f32 %v905, %v905
    %v970 = vmul.f32 %v906, %v906
    %v971 = vmul.f32 %v907, %v907
    %v972 = vmul.f32 %v908, %v908
    %v973 = vmul.f32 %v909, %v909
    %v974 = vmul.f32 %v910, %v910
    %v975 = vmul.f32 %v911, %v911
    %v976 = vmul.f32 %v912, %v912
    %v977 = vmul.f32 %v913, %v913
    %v978 = vmul.f32 %v914, %v914
    %v979 = vmul.f32 %v915, %v915
    %v980 = vmul.f32 %v916, %v916
    %v981 = vmul.f32 %v917, %v917
    %v982 = vmul.f32 %v918, %v918
    %v983 = vmul.f32 %v919, %v919
    %v984 = vmul.f32 %v920, %v920
    %v985 = vmul.f32 %v921, %v921
    %v986 = vmul.f32 %v922, %v922
    %v987 = vmul.f32 %v923, %v923
    %v988 = vmul.f32 %v924, %v924
    %v989 = vmul.f32 %v925, %v925
    %v990 = vmul.f32 %v926, %v926
    %v991 = vmul.f32 %v927, %v927
    %v992 = vmul.f32 %v928, %v928
    %v993 = vmul.f32 %v929, %v929
    %v994 = vmul.f32 %v930, %v930
    %v995 = vmul.f32 %v931, %v931
    %v996 = vmul.f32 %v932, %v932
    %v997 = vmul.f32 %v933, %v933
    %v998 = vmul.f32 %v934, %v934
    %v999 = vmul.f32 %v935, %v935
    %v1000 = vmul.f32 %v936, %v936
    %v1001 = vmul.f32 %v937, %v937
    %v1002 = vmul.f32 %v938, %v938
    %v1003 = vmul.f32 %v939, %v939
    %v1004 = vmul.f32 %v940, %v940
    %v1005 = vmul.f32 %v941, %v941
    %v1006 = vmul.f32 %v942, %v942
    %v1007 = vmul.f32 %v943, %v943
    %v1008 = vmul.f32 %v944, %v944
    %v1009 = vmul.f32 %v945, %v945
    %v1010 = vmul.f32 %v946, %v946
    %v1011 = vmul.f32 %v947, %v947
    %v1012 = vmul.f32 %v948, %v948
    %v1013 = vmul.f32 %v949, %v949
    %v1014 = vmul.f32 %v950, %v950
    %v1015 = vmul.f32 %v951, %v951
    %v1016 = vmul.f32 %v952, %v952
    %v1017 = vmul.f32 %v953, %v953
    %v1018 = vmul.f32 %v954, %v954
    %v1019 = vmul.f32 %v955, %v955
    %v1020 = vmul.f32 %v956, %v956
    %v1021 = vmul.f32 %v957, %v957
    %v1022 = vmul.f32 %v958, %v958
    %v1023 = vmul.f32 %v959, %v959
    %v1024 = vsel %vm760, %v960, 0.0
    %v1025 = vsel %vm760, %v961, 0.0
    %v1026 = vadd.f32 %v1024, %v1025
    %v1027 = vsel %vm760, %v962, 0.0
    %v1028 = vadd.f32 %v1026, %v1027
    %v1029 = vsel %vm760, %v963, 0.0
    %v1030 = vadd.f32 %v1028, %v1029
    %v1031 = vsel %vm760, %v964, 0.0
    %v1032 = vadd.f32 %v1030, %v1031
    %v1033 = vsel %vm760, %v965, 0.0
    %v1034 = vadd.f32 %v1032, %v1033
    %v1035 = vsel %vm760, %v966, 0.0
    %v1036 = vadd.f32 %v1034, %v1035
    %v1037 = vsel %vm760, %v967, 0.0
    %v1038 = vadd.f32 %v1036, %v1037
    %v1039 = vsel %vm760, %v968, 0.0
    %v1040 = vadd.f32 %v1038, %v1039
    %v1041 = vsel %vm760, %v969, 0.0
    %v1042 = vadd.f32 %v1040, %v1041
    %v1043 = vsel %vm760, %v970, 0.0
    %v1044 = vadd.f32 %v1042, %v1043
    %v1045 = vsel %vm760, %v971, 0.0
    %v1046 = vadd.f32 %v1044, %v1045
    %v1047 = vsel %vm760, %v972, 0.0
    %v1048 = vadd.f32 %v1046, %v1047
    %v1049 = vsel %vm760, %v973, 0.0
    %v1050 = vadd.f32 %v1048, %v1049
    %v1051 = vsel %vm760, %v974, 0.0
    %v1052 = vadd.f32 %v1050, %v1051
    %v1053 = vsel %vm760, %v975, 0.0
    %v1054 = vadd.f32 %v1052, %v1053
    %v1055 = vsel %vm760, %v976, 0.0
    %v1056 = vadd.f32 %v1054, %v1055
    %v1057 = vsel %vm760, %v977, 0.0
    %v1058 = vadd.f32 %v1056, %v1057
    %v1059 = vsel %vm760, %v978, 0.0
    %v1060 = vadd.f32 %v1058, %v1059
    %v1061 = vsel %vm760, %v979, 0.0
    %v1062 = vadd.f32 %v1060, %v1061
    %v1063 = vsel %vm760, %v980, 0.0
    %v1064 = vadd.f32 %v1062, %v1063
    %v1065 = vsel %vm760, %v981, 0.0
    %v1066 = vadd.f32 %v1064, %v1065
    %v1067 = vsel %vm760, %v982, 0.0
    %v1068 = vadd.f32 %v1066, %v1067
    %v1069 = vsel %vm760, %v983, 0.0
    %v1070 = vadd.f32 %v1068, %v1069
    %v1071 = vsel %vm760, %v984, 0.0
    %v1072 = vadd.f32 %v1070, %v1071
    %v1073 = vsel %vm760, %v985, 0.0
    %v1074 = vadd.f32 %v1072, %v1073
    %v1075 = vsel %vm760, %v986, 0.0
    %v1076 = vadd.f32 %v1074, %v1075
    %v1077 = vsel %vm760, %v987, 0.0
    %v1078 = vadd.f32 %v1076, %v1077
    %v1079 = vsel %vm760, %v988, 0.0
    %v1080 = vadd.f32 %v1078, %v1079
    %v1081 = vsel %vm760, %v989, 0.0
    %v1082 = vadd.f32 %v1080, %v1081
    %v1083 = vsel %vm760, %v990, 0.0
    %v1084 = vadd.f32 %v1082, %v1083
    %v1085 = vsel %vm760, %v991, 0.0
    %v1086 = vadd.f32 %v1084, %v1085
    %v1087 = vsel %vm760, %v992, 0.0
    %v1088 = vadd.f32 %v1086, %v1087
    %v1089 = vsel %vm760, %v993, 0.0
    %v1090 = vadd.f32 %v1088, %v1089
    %v1091 = vsel %vm760, %v994, 0.0
    %v1092 = vadd.f32 %v1090, %v1091
    %v1093 = vsel %vm760, %v995, 0.0
    %v1094 = vadd.f32 %v1092, %v1093
    %v1095 = vsel %vm760, %v996, 0.0
    %v1096 = vadd.f32 %v1094, %v1095
    %v1097 = vsel %vm760, %v997, 0.0
    %v1098 = vadd.f32 %v1096, %v1097
    %v1099 = vsel %vm760, %v998, 0.0
    %v1100 = vadd.f32 %v1098, %v1099
    %v1101 = vsel %vm760, %v999, 0.0
    %v1102 = vadd.f32 %v1100, %v1101
    %v1103 = vsel %vm760, %v1000, 0.0
    %v1104 = vadd.f32 %v1102, %v1103
    %v1105 = vsel %vm760, %v1001, 0.0
    %v1106 = vadd.f32 %v1104, %v1105
    %v1107 = vsel %vm760, %v1002, 0.0
    %v1108 = vadd.f32 %v1106, %v1107
    %v1109 = vsel %vm760, %v1003, 0.0
    %v1110 = vadd.f32 %v1108, %v1109
    %v1111 = vsel %vm760, %v1004, 0.0
    %v1112 = vadd.f32 %v1110, %v1111
    %v1113 = vsel %vm760, %v1005, 0.0
    %v1114 = vadd.f32 %v1112, %v1113
    %v1115 = vsel %vm760, %v1006, 0.0
    %v1116 = vadd.f32 %v1114, %v1115
    %v1117 = vsel %vm760, %v1007, 0.0
    %v1118 = vadd.f32 %v1116, %v1117
    %v1119 = vsel %vm760, %v1008, 0.0
    %v1120 = vadd.f32 %v1118, %v1119
    %v1121 = vsel %vm760, %v1009, 0.0
    %v1122 = vadd.f32 %v1120, %v1121
    %v1123 = vsel %vm760, %v1010, 0.0
    %v1124 = vadd.f32 %v1122, %v1123
    %v1125 = vsel %vm760, %v1011, 0.0
    %v1126 = vadd.f32 %v1124, %v1125
    %v1127 = vsel %vm760, %v1012, 0.0
    %v1128 = vadd.f32 %v1126, %v1127
    %v1129 = vsel %vm760, %v1013, 0.0
    %v1130 = vadd.f32 %v1128, %v1129
    %v1131 = vsel %vm760, %v1014, 0.0
    %v1132 = vadd.f32 %v1130, %v1131
    %v1133 = vsel %vm760, %v1015, 0.0
    %v1134 = vadd.f32 %v1132, %v1133
    %v1135 = vsel %vm760, %v1016, 0.0
    %v1136 = vadd.f32 %v1134, %v1135
    %v1137 = vsel %vm760, %v1017, 0.0
    %v1138 = vadd.f32 %v1136, %v1137
    %v1139 = vsel %vm760, %v1018, 0.0
    %v1140 = vadd.f32 %v1138, %v1139
    %v1141 = vsel %vm760, %v1019, 0.0
    %v1142 = vadd.f32 %v1140, %v1141
    %v1143 = vsel %vm760, %v1020, 0.0
    %v1144 = vadd.f32 %v1142, %v1143
    %v1145 = vsel %vm760, %v1021, 0.0
    %v1146 = vadd.f32 %v1144, %v1145
    %v1147 = vsel %vm760, %v1022, 0.0
    %v1148 = vadd.f32 %v1146, %v1147
    %v1149 = vsel %vm760, %v1023, 0.0
    %v1150 = vadd.f32 %v1148, %v1149
    %v1151 = vrot.slane %v1150, 4
    %v1152 = vadd.f32 %v1150, %v1151
    %v1153 = vrot.slane %v1152, 2
    %v1154 = vadd.f32 %v1152, %v1153
    %v1155 = vrot.slane %v1154, 1
    %v1156 = vadd.f32 %v1154, %v1155
    %v1157 = vmul.f32 %v1156, %v894
    %v1158 = vld [vmem:[%s3] sm:$0x1]
    %v1160 = vlaneseq
    %v1161 = vshrl.u32 %v1160, 7
    %v1162 = vsub.s32 0, %v1161
    %v1163 = vrot.slane %v1158, %v1162
    %v1165 = vmul.f32 %v1163, %v896
    %v1166 = vmul.f32 %v1163, %v897
    %v1167 = vmul.f32 %v1163, %v898
    %v1168 = vmul.f32 %v1163, %v899
    %v1169 = vmul.f32 %v1163, %v900
    %v1170 = vmul.f32 %v1163, %v901
    %v1171 = vmul.f32 %v1163, %v902
    %v1172 = vmul.f32 %v1163, %v903
    %v1173 = vmul.f32 %v1163, %v904
    %v1174 = vmul.f32 %v1163, %v905
    %v1175 = vmul.f32 %v1163, %v906
    %v1176 = vmul.f32 %v1163, %v907
    %v1177 = vmul.f32 %v1163, %v908
    %v1178 = vmul.f32 %v1163, %v909
    %v1179 = vmul.f32 %v1163, %v910
    %v1180 = vmul.f32 %v1163, %v911
    %v1181 = vmul.f32 %v1163, %v912
    %v1182 = vmul.f32 %v1163, %v913
    %v1183 = vmul.f32 %v1163, %v914
    %v1184 = vmul.f32 %v1163, %v915
    %v1185 = vmul.f32 %v1163, %v916
    %v1186 = vmul.f32 %v1163, %v917
    %v1187 = vmul.f32 %v1163, %v918
    %v1188 = vmul.f32 %v1163, %v919
    %v1189 = vmul.f32 %v1163, %v920
    %v1190 = vmul.f32 %v1163, %v921
    %v1191 = vmul.f32 %v1163, %v922
    %v1192 = vmul.f32 %v1163, %v923
    %v1193 = vmul.f32 %v1163, %v924
    %v1194 = vmul.f32 %v1163, %v925
    %v1195 = vmul.f32 %v1163, %v926
    %v1196 = vmul.f32 %v1163, %v927
    %v1197 = vmul.f32 %v1163, %v928
    %v1198 = vmul.f32 %v1163, %v929
    %v1199 = vmul.f32 %v1163, %v930
    %v1200 = vmul.f32 %v1163, %v931
    %v1201 = vmul.f32 %v1163, %v932
    %v1202 = vmul.f32 %v1163, %v933
    %v1203 = vmul.f32 %v1163, %v934
    %v1204 = vmul.f32 %v1163, %v935
    %v1205 = vmul.f32 %v1163, %v936
    %v1206 = vmul.f32 %v1163, %v937
    %v1207 = vmul.f32 %v1163, %v938
    %v1208 = vmul.f32 %v1163, %v939
    %v1209 = vmul.f32 %v1163, %v940
    %v1210 = vmul.f32 %v1163, %v941
    %v1211 = vmul.f32 %v1163, %v942
    %v1212 = vmul.f32 %v1163, %v943
    %v1213 = vmul.f32 %v1163, %v944
    %v1214 = vmul.f32 %v1163, %v945
    %v1215 = vmul.f32 %v1163, %v946
    %v1216 = vmul.f32 %v1163, %v947
    %v1217 = vmul.f32 %v1163, %v948
    %v1218 = vmul.f32 %v1163, %v949
    %v1219 = vmul.f32 %v1163, %v950
    %v1220 = vmul.f32 %v1163, %v951
    %v1221 = vmul.f32 %v1163, %v952
    %v1222 = vmul.f32 %v1163, %v953
    %v1223 = vmul.f32 %v1163, %v954
    %v1224 = vmul.f32 %v1163, %v955
    %v1225 = vmul.f32 %v1163, %v956
    %v1226 = vmul.f32 %v1163, %v957
    %v1227 = vmul.f32 %v1163, %v958
    %v1228 = vmul.f32 %v1163, %v959
    %v1229 = vadd.f32 %v1157, 1e-05
    %v1230 = vrsqrt.pop %v1229
    %v1231 = vmul.f32 %v1165, %v1230
    %v1232 = vmul.f32 %v1166, %v1230
    %v1233 = vmul.f32 %v1167, %v1230
    %v1234 = vmul.f32 %v1168, %v1230
    %v1235 = vmul.f32 %v1169, %v1230
    %v1236 = vmul.f32 %v1170, %v1230
    %v1237 = vmul.f32 %v1171, %v1230
    %v1238 = vmul.f32 %v1172, %v1230
    %v1239 = vmul.f32 %v1173, %v1230
    %v1240 = vmul.f32 %v1174, %v1230
    %v1241 = vmul.f32 %v1175, %v1230
    %v1242 = vmul.f32 %v1176, %v1230
    %v1243 = vmul.f32 %v1177, %v1230
    %v1244 = vmul.f32 %v1178, %v1230
    %v1245 = vmul.f32 %v1179, %v1230
    %v1246 = vmul.f32 %v1180, %v1230
    %v1247 = vmul.f32 %v1181, %v1230
    %v1248 = vmul.f32 %v1182, %v1230
    %v1249 = vmul.f32 %v1183, %v1230
    %v1250 = vmul.f32 %v1184, %v1230
    %v1251 = vmul.f32 %v1185, %v1230
    %v1252 = vmul.f32 %v1186, %v1230
    %v1253 = vmul.f32 %v1187, %v1230
    %v1254 = vmul.f32 %v1188, %v1230
    %v1255 = vmul.f32 %v1189, %v1230
    %v1256 = vmul.f32 %v1190, %v1230
    %v1257 = vmul.f32 %v1191, %v1230
    %v1258 = vmul.f32 %v1192, %v1230
    %v1259 = vmul.f32 %v1193, %v1230
    %v1260 = vmul.f32 %v1194, %v1230
    %v1261 = vmul.f32 %v1195, %v1230
    %v1262 = vmul.f32 %v1196, %v1230
    %v1263 = vmul.f32 %v1197, %v1230
    %v1264 = vmul.f32 %v1198, %v1230
    %v1265 = vmul.f32 %v1199, %v1230
    %v1266 = vmul.f32 %v1200, %v1230
    %v1267 = vmul.f32 %v1201, %v1230
    %v1268 = vmul.f32 %v1202, %v1230
    %v1269 = vmul.f32 %v1203, %v1230
    %v1270 = vmul.f32 %v1204, %v1230
    %v1271 = vmul.f32 %v1205, %v1230
    %v1272 = vmul.f32 %v1206, %v1230
    %v1273 = vmul.f32 %v1207, %v1230
    %v1274 = vmul.f32 %v1208, %v1230
    %v1275 = vmul.f32 %v1209, %v1230
    %v1276 = vmul.f32 %v1210, %v1230
    %v1277 = vmul.f32 %v1211, %v1230
    %v1278 = vmul.f32 %v1212, %v1230
    %v1279 = vmul.f32 %v1213, %v1230
    %v1280 = vmul.f32 %v1214, %v1230
    %v1281 = vmul.f32 %v1215, %v1230
    %v1282 = vmul.f32 %v1216, %v1230
    %v1283 = vmul.f32 %v1217, %v1230
    %v1284 = vmul.f32 %v1218, %v1230
    %v1285 = vmul.f32 %v1219, %v1230
    %v1286 = vmul.f32 %v1220, %v1230
    %v1287 = vmul.f32 %v1221, %v1230
    %v1288 = vmul.f32 %v1222, %v1230
    %v1289 = vmul.f32 %v1223, %v1230
    %v1290 = vmul.f32 %v1224, %v1230
    %v1291 = vmul.f32 %v1225, %v1230
    %v1292 = vmul.f32 %v1226, %v1230
    %v1293 = vmul.f32 %v1227, %v1230
    %v1294 = vmul.f32 %v1228, %v1230
    %v1295 = vld [vmem:[%s4] sm:$0x1]
    %v1297 = vlaneseq
    %v1298 = vshrl.u32 %v1297, 7
    %v1299 = vsub.s32 0, %v1298
    %v1300 = vrot.slane %v1295, %v1299
    %v1302 = vadd.f32 %v1231, %v1300
    %v1303 = vadd.f32 %v1232, %v1300
    %v1304 = vadd.f32 %v1233, %v1300
    %v1305 = vadd.f32 %v1234, %v1300
    %v1306 = vadd.f32 %v1235, %v1300
    %v1307 = vadd.f32 %v1236, %v1300
    %v1308 = vadd.f32 %v1237, %v1300
    %v1309 = vadd.f32 %v1238, %v1300
    %v1310 = vadd.f32 %v1239, %v1300
    %v1311 = vadd.f32 %v1240, %v1300
    %v1312 = vadd.f32 %v1241, %v1300
    %v1313 = vadd.f32 %v1242, %v1300
    %v1314 = vadd.f32 %v1243, %v1300
    %v1315 = vadd.f32 %v1244, %v1300
    %v1316 = vadd.f32 %v1245, %v1300
    %v1317 = vadd.f32 %v1246, %v1300
    %v1318 = vadd.f32 %v1247, %v1300
    %v1319 = vadd.f32 %v1248, %v1300
    %v1320 = vadd.f32 %v1249, %v1300
    %v1321 = vadd.f32 %v1250, %v1300
    %v1322 = vadd.f32 %v1251, %v1300
    %v1323 = vadd.f32 %v1252, %v1300
    %v1324 = vadd.f32 %v1253, %v1300
    %v1325 = vadd.f32 %v1254, %v1300
    %v1326 = vadd.f32 %v1255, %v1300
    %v1327 = vadd.f32 %v1256, %v1300
    %v1328 = vadd.f32 %v1257, %v1300
    %v1329 = vadd.f32 %v1258, %v1300
    %v1330 = vadd.f32 %v1259, %v1300
    %v1331 = vadd.f32 %v1260, %v1300
    %v1332 = vadd.f32 %v1261, %v1300
    %v1333 = vadd.f32 %v1262, %v1300
    %v1334 = vadd.f32 %v1263, %v1300
    %v1335 = vadd.f32 %v1264, %v1300
    %v1336 = vadd.f32 %v1265, %v1300
    %v1337 = vadd.f32 %v1266, %v1300
    %v1338 = vadd.f32 %v1267, %v1300
    %v1339 = vadd.f32 %v1268, %v1300
    %v1340 = vadd.f32 %v1269, %v1300
    %v1341 = vadd.f32 %v1270, %v1300
    %v1342 = vadd.f32 %v1271, %v1300
    %v1343 = vadd.f32 %v1272, %v1300
    %v1344 = vadd.f32 %v1273, %v1300
    %v1345 = vadd.f32 %v1274, %v1300
    %v1346 = vadd.f32 %v1275, %v1300
    %v1347 = vadd.f32 %v1276, %v1300
    %v1348 = vadd.f32 %v1277, %v1300
    %v1349 = vadd.f32 %v1278, %v1300
    %v1350 = vadd.f32 %v1279, %v1300
    %v1351 = vadd.f32 %v1280, %v1300
    %v1352 = vadd.f32 %v1281, %v1300
    %v1353 = vadd.f32 %v1282, %v1300
    %v1354 = vadd.f32 %v1283, %v1300
    %v1355 = vadd.f32 %v1284, %v1300
    %v1356 = vadd.f32 %v1285, %v1300
    %v1357 = vadd.f32 %v1286, %v1300
    %v1358 = vadd.f32 %v1287, %v1300
    %v1359 = vadd.f32 %v1288, %v1300
    %v1360 = vadd.f32 %v1289, %v1300
    %v1361 = vadd.f32 %v1290, %v1300
    %v1362 = vadd.f32 %v1291, %v1300
    %v1363 = vadd.f32 %v1292, %v1300
    %v1364 = vadd.f32 %v1293, %v1300
    %v1365 = vadd.f32 %v1294, %v1300
    %v1366 = vlaneseq
    %v1367 = vshrl.u32 %v1366, 7
    %v1368 = vadd.s32 %v1367, 8
    %v1369 = vadd.s32 %v1367, 16
    %v1370 = vadd.s32 %v1367, 24
    %v1371 = vadd.s32 %v1367, 32
    %v1372 = vadd.s32 %v1367, 40
    %v1373 = vadd.s32 %v1367, 48
    %v1374 = vadd.s32 %v1367, 56
    %vm1375 = vcmp.lt.s32.totalorder %v1367, 0
    %v1376 = vsub.s32 0, %v1367
    %v1377 = vsel %vm1375, %v1376, %v1367
    %v1378 = vshrl.u32 %v1377, 3
    %v1379 = vand.u32 %v1377, 7
    %v1380 = vsub.s32 0, %v1379
    %v1381 = vsel %vm1375, %v1380, %v1379
    %vm1382 = vcmp.lt.s32.totalorder %v1368, 0
    %v1383 = vsub.s32 0, %v1368
    %v1384 = vsel %vm1382, %v1383, %v1368
    %v1385 = vshrl.u32 %v1384, 3
    %v1386 = vand.u32 %v1384, 7
    %v1387 = vsub.s32 0, %v1386
    %v1388 = vsel %vm1382, %v1387, %v1386
    %vm1389 = vcmp.lt.s32.totalorder %v1369, 0
    %v1390 = vsub.s32 0, %v1369
    %v1391 = vsel %vm1389, %v1390, %v1369
    %v1392 = vshrl.u32 %v1391, 3
    %v1393 = vand.u32 %v1391, 7
    %v1394 = vsub.s32 0, %v1393
    %v1395 = vsel %vm1389, %v1394, %v1393
    %vm1396 = vcmp.lt.s32.totalorder %v1370, 0
    %v1397 = vsub.s32 0, %v1370
    %v1398 = vsel %vm1396, %v1397, %v1370
    %v1399 = vshrl.u32 %v1398, 3
    %v1400 = vand.u32 %v1398, 7
    %v1401 = vsub.s32 0, %v1400
    %v1402 = vsel %vm1396, %v1401, %v1400
    %vm1403 = vcmp.lt.s32.totalorder %v1371, 0
    %v1404 = vsub.s32 0, %v1371
    %v1405 = vsel %vm1403, %v1404, %v1371
    %v1406 = vshrl.u32 %v1405, 3
    %v1407 = vand.u32 %v1405, 7
    %v1408 = vsub.s32 0, %v1407
    %v1409 = vsel %vm1403, %v1408, %v1407
    %vm1410 = vcmp.lt.s32.totalorder %v1372, 0
    %v1411 = vsub.s32 0, %v1372
    %v1412 = vsel %vm1410, %v1411, %v1372
    %v1413 = vshrl.u32 %v1412, 3
    %v1414 = vand.u32 %v1412, 7
    %v1415 = vsub.s32 0, %v1414
    %v1416 = vsel %vm1410, %v1415, %v1414
    %vm1417 = vcmp.lt.s32.totalorder %v1373, 0
    %v1418 = vsub.s32 0, %v1373
    %v1419 = vsel %vm1417, %v1418, %v1373
    %v1420 = vshrl.u32 %v1419, 3
    %v1421 = vand.u32 %v1419, 7
    %v1422 = vsub.s32 0, %v1421
    %v1423 = vsel %vm1417, %v1422, %v1421
    %vm1424 = vcmp.lt.s32.totalorder %v1374, 0
    %v1425 = vsub.s32 0, %v1374
    %v1426 = vsel %vm1424, %v1425, %v1374
    %v1427 = vshrl.u32 %v1426, 3
    %v1428 = vand.u32 %v1426, 7
    %v1429 = vsub.s32 0, %v1428
    %v1430 = vsel %vm1424, %v1429, %v1428
    %vm1431 = vcmp.ne.s32.totalorder %v1381, 0
    %vm1432 = vcmp.ne.s32.totalorder %v1388, 0
    %vm1433 = vcmp.ne.s32.totalorder %v1395, 0
    %vm1434 = vcmp.ne.s32.totalorder %v1402, 0
    %vm1435 = vcmp.ne.s32.totalorder %v1409, 0
    %vm1436 = vcmp.ne.s32.totalorder %v1416, 0
    %vm1437 = vcmp.ne.s32.totalorder %v1423, 0
    %vm1438 = vcmp.ne.s32.totalorder %v1430, 0
    %vm1439 = vcmp.lt.s32.totalorder %v1381, 0
    %vm1440 = vcmp.lt.s32.totalorder %v1388, 0
    %vm1441 = vcmp.lt.s32.totalorder %v1395, 0
    %vm1442 = vcmp.lt.s32.totalorder %v1402, 0
    %vm1443 = vcmp.lt.s32.totalorder %v1409, 0
    %vm1444 = vcmp.lt.s32.totalorder %v1416, 0
    %vm1445 = vcmp.lt.s32.totalorder %v1423, 0
    %vm1446 = vcmp.lt.s32.totalorder %v1430, 0
    %vm1447 = vmand %vm1439, %vm1431
    %vm1448 = vmand %vm1440, %vm1432
    %vm1449 = vmand %vm1441, %vm1433
    %vm1450 = vmand %vm1442, %vm1434
    %vm1451 = vmand %vm1443, %vm1435
    %vm1452 = vmand %vm1444, %vm1436
    %vm1453 = vmand %vm1445, %vm1437
    %vm1454 = vmand %vm1446, %vm1438
    %v1455 = vadd.s32 %v1381, 8
    %v1456 = vadd.s32 %v1388, 8
    %v1457 = vadd.s32 %v1395, 8
    %v1458 = vadd.s32 %v1402, 8
    %v1459 = vadd.s32 %v1409, 8
    %v1460 = vadd.s32 %v1416, 8
    %v1461 = vadd.s32 %v1423, 8
    %v1462 = vadd.s32 %v1430, 8
    %v1463 = vsel %vm1447, %v1455, %v1381
    %v1464 = vsel %vm1448, %v1456, %v1388
    %v1465 = vsel %vm1449, %v1457, %v1395
    %v1466 = vsel %vm1450, %v1458, %v1402
    %v1467 = vsel %vm1451, %v1459, %v1409
    %v1468 = vsel %vm1452, %v1460, %v1416
    %v1469 = vsel %vm1453, %v1461, %v1423
    %v1470 = vsel %vm1454, %v1462, %v1430
    %vm1471 = vcmp.ne.s32.totalorder %v1463, 0
    %vm1472 = vcmp.ne.s32.totalorder %v1464, 0
    %vm1473 = vcmp.ne.s32.totalorder %v1465, 0
    %vm1474 = vcmp.ne.s32.totalorder %v1466, 0
    %vm1475 = vcmp.ne.s32.totalorder %v1467, 0
    %vm1476 = vcmp.ne.s32.totalorder %v1468, 0
    %vm1477 = vcmp.ne.s32.totalorder %v1469, 0
    %vm1478 = vcmp.ne.s32.totalorder %v1470, 0
    %v1479 = vsel %vm1471, 1, 0
    %v1480 = vsel %vm1472, 1, 0
    %v1481 = vsel %vm1473, 1, 0
    %v1482 = vsel %vm1474, 1, 0
    %v1483 = vsel %vm1475, 1, 0
    %v1484 = vsel %vm1476, 1, 0
    %v1485 = vsel %vm1477, 1, 0
    %v1486 = vsel %vm1478, 1, 0
    %v1487 = vcvt.s32.f32 %v1479
    %v1488 = vcvt.s32.f32 %v1480
    %v1489 = vcvt.s32.f32 %v1481
    %v1490 = vcvt.s32.f32 %v1482
    %v1491 = vcvt.s32.f32 %v1483
    %v1492 = vcvt.s32.f32 %v1484
    %v1493 = vcvt.s32.f32 %v1485
    %v1494 = vcvt.s32.f32 %v1486
    %vm1503 = vcmask 1040384
    %v1504 = vrot.slane %v1326, 7
    %v1505 = vrot.slane %v1327, 7
    %v1506 = vsel %vm1503, %v1504, %v1505
    %v1507 = vrot.slane %v1328, 7
    %v1508 = vsel %vm1503, %v1505, %v1507
    %v1509 = vrot.slane %v1329, 7
    %v1510 = vsel %vm1503, %v1507, %v1509
    %v1511 = vrot.slane %v1330, 7
    %v1512 = vsel %vm1503, %v1509, %v1511
    %v1513 = vrot.slane %v1331, 7
    %v1514 = vsel %vm1503, %v1511, %v1513
    %v1515 = vrot.slane %v1332, 7
    %v1516 = vsel %vm1503, %v1513, %v1515
    %v1517 = vrot.slane %v1333, 7
    %v1518 = vsel %vm1503, %v1515, %v1517
    %v1527 = vsel %vm1503, 0.0, %v1504
    %v1528 = vmul.f32 %v1527, %v1487
    %v1529 = vmul.f32 %v1506, %v1488
    %v1530 = vmul.f32 %v1508, %v1489
    %v1531 = vmul.f32 %v1510, %v1490
    %v1532 = vmul.f32 %v1512, %v1491
    %v1533 = vmul.f32 %v1514, %v1492
    %v1534 = vmul.f32 %v1516, %v1493
    %v1535 = vmul.f32 %v1518, %v1494
    %v1544 = vrot.slane %v1310, 7
    %v1545 = vrot.slane %v1311, 7
    %v1546 = vsel %vm1503, %v1544, %v1545
    %v1547 = vrot.slane %v1312, 7
    %v1548 = vsel %vm1503, %v1545, %v1547
    %v1549 = vrot.slane %v1313, 7
    %v1550 = vsel %vm1503, %v1547, %v1549
    %v1551 = vrot.slane %v1314, 7
    %v1552 = vsel %vm1503, %v1549, %v1551
    %v1553 = vrot.slane %v1315, 7
    %v1554 = vsel %vm1503, %v1551, %v1553
    %v1555 = vrot.slane %v1316, 7
    %v1556 = vsel %vm1503, %v1553, %v1555
    %v1557 = vrot.slane %v1317, 7
    %v1558 = vsel %vm1503, %v1555, %v1557
    %v1567 = vsel %vm1503, 0.0, %v1544
    %v1568 = vmul.f32 %v1567, %v1487
    %v1569 = vmul.f32 %v1546, %v1488
    %v1570 = vmul.f32 %v1548, %v1489
    %v1571 = vmul.f32 %v1550, %v1490
    %v1572 = vmul.f32 %v1552, %v1491
    %v1573 = vmul.f32 %v1554, %v1492
    %v1574 = vmul.f32 %v1556, %v1493
    %v1575 = vmul.f32 %v1558, %v1494
    %1584 = vrot.lane.b32.xlu0 0.0, 16
    %v1585 = vpop.permute.xlu0 %1584
    %1586 = vrot.lane.b32.xlu0 %v1318, 16
    %v1587 = vpop.permute.xlu0 %1586
    %1588 = vrot.lane.b32.xlu0 %v1319, 16
    %v1589 = vpop.permute.xlu0 %1588
    %1590 = vrot.lane.b32.xlu0 %v1320, 16
    %v1591 = vpop.permute.xlu0 %1590
    %1592 = vrot.lane.b32.xlu0 %v1321, 16
    %v1593 = vpop.permute.xlu0 %1592
    %1594 = vrot.lane.b32.xlu0 %v1322, 16
    %v1595 = vpop.permute.xlu0 %1594
    %1596 = vrot.lane.b32.xlu0 %v1323, 16
    %v1597 = vpop.permute.xlu0 %1596
    %1598 = vrot.lane.b32.xlu0 %v1324, 16
    %v1599 = vpop.permute.xlu0 %1598
    %1608 = vrot.lane.b32.xlu0 0.0, 32
    %v1609 = vpop.permute.xlu0 %1608
    %1610 = vrot.lane.b32.xlu0 %v1326, 32
    %v1611 = vpop.permute.xlu0 %1610
    %1612 = vrot.lane.b32.xlu0 %v1327, 32
    %v1613 = vpop.permute.xlu0 %1612
    %1614 = vrot.lane.b32.xlu0 %v1328, 32
    %v1615 = vpop.permute.xlu0 %1614
    %1616 = vrot.lane.b32.xlu0 %v1329, 32
    %v1617 = vpop.permute.xlu0 %1616
    %1618 = vrot.lane.b32.xlu0 %v1330, 32
    %v1619 = vpop.permute.xlu0 %1618
    %1620 = vrot.lane.b32.xlu0 %v1331, 32
    %v1621 = vpop.permute.xlu0 %1620
    %1622 = vrot.lane.b32.xlu0 %v1332, 32
    %v1623 = vpop.permute.xlu0 %1622
    %1640 = vrot.lane.b32.xlu0 %v1568, 48
    %v1641 = vpop.permute.xlu0 %1640
    %1642 = vrot.lane.b32.xlu0 %v1569, 48
    %v1643 = vpop.permute.xlu0 %1642
    %1644 = vrot.lane.b32.xlu0 %v1570, 48
    %v1645 = vpop.permute.xlu0 %1644
    %1646 = vrot.lane.b32.xlu0 %v1571, 48
    %v1647 = vpop.permute.xlu0 %1646
    %1648 = vrot.lane.b32.xlu0 %v1572, 48
    %v1649 = vpop.permute.xlu0 %1648
    %1650 = vrot.lane.b32.xlu0 %v1573, 48
    %v1651 = vpop.permute.xlu0 %1650
    %1652 = vrot.lane.b32.xlu0 %v1574, 48
    %v1653 = vpop.permute.xlu0 %1652
    %1654 = vrot.lane.b32.xlu0 %v1575, 48
    %v1655 = vpop.permute.xlu0 %1654
    %1672 = vrot.lane.b32.xlu0 %v1302, 64
    %v1673 = vpop.permute.xlu0 %1672
    %1674 = vrot.lane.b32.xlu0 %v1303, 64
    %v1675 = vpop.permute.xlu0 %1674
    %1676 = vrot.lane.b32.xlu0 %v1304, 64
    %v1677 = vpop.permute.xlu0 %1676
    %1678 = vrot.lane.b32.xlu0 %v1305, 64
    %v1679 = vpop.permute.xlu0 %1678
    %1680 = vrot.lane.b32.xlu0 %v1306, 64
    %v1681 = vpop.permute.xlu0 %1680
    %1682 = vrot.lane.b32.xlu0 %v1307, 64
    %v1683 = vpop.permute.xlu0 %1682
    %1684 = vrot.lane.b32.xlu0 %v1308, 64
    %v1685 = vpop.permute.xlu0 %1684
    %1686 = vrot.lane.b32.xlu0 %v1309, 64
    %v1687 = vpop.permute.xlu0 %1686
    %1696 = vrot.lane.b32.xlu0 %v1310, 80
    %v1697 = vpop.permute.xlu0 %1696
    %1698 = vrot.lane.b32.xlu0 %v1311, 80
    %v1699 = vpop.permute.xlu0 %1698
    %1700 = vrot.lane.b32.xlu0 %v1312, 80
    %v1701 = vpop.permute.xlu0 %1700
    %1702 = vrot.lane.b32.xlu0 %v1313, 80
    %v1703 = vpop.permute.xlu0 %1702
    %1704 = vrot.lane.b32.xlu0 %v1314, 80
    %v1705 = vpop.permute.xlu0 %1704
    %1706 = vrot.lane.b32.xlu0 %v1315, 80
    %v1707 = vpop.permute.xlu0 %1706
    %1708 = vrot.lane.b32.xlu0 %v1316, 80
    %v1709 = vpop.permute.xlu0 %1708
    %1710 = vrot.lane.b32.xlu0 %v1317, 80
    %v1711 = vpop.permute.xlu0 %1710
    %1728 = vrot.lane.b32.xlu0 %v1528, 96
    %v1729 = vpop.permute.xlu0 %1728
    %1730 = vrot.lane.b32.xlu0 %v1529, 96
    %v1731 = vpop.permute.xlu0 %1730
    %1732 = vrot.lane.b32.xlu0 %v1530, 96
    %v1733 = vpop.permute.xlu0 %1732
    %1734 = vrot.lane.b32.xlu0 %v1531, 96
    %v1735 = vpop.permute.xlu0 %1734
    %1736 = vrot.lane.b32.xlu0 %v1532, 96
    %v1737 = vpop.permute.xlu0 %1736
    %1738 = vrot.lane.b32.xlu0 %v1533, 96
    %v1739 = vpop.permute.xlu0 %1738
    %1740 = vrot.lane.b32.xlu0 %v1534, 96
    %v1741 = vpop.permute.xlu0 %1740
    %1742 = vrot.lane.b32.xlu0 %v1535, 96
    %v1743 = vpop.permute.xlu0 %1742
    %1753 = vrot.lane.b32.xlu0 %v1318, 112
    %v1754 = vpop.permute.xlu0 %1753
    %1755 = vrot.lane.b32.xlu0 %v1319, 112
    %v1756 = vpop.permute.xlu0 %1755
    %1757 = vrot.lane.b32.xlu0 %v1320, 112
    %v1758 = vpop.permute.xlu0 %1757
    %1759 = vrot.lane.b32.xlu0 %v1321, 112
    %v1760 = vpop.permute.xlu0 %1759
    %1761 = vrot.lane.b32.xlu0 %v1322, 112
    %v1762 = vpop.permute.xlu0 %1761
    %1763 = vrot.lane.b32.xlu0 %v1323, 112
    %v1764 = vpop.permute.xlu0 %1763
    %1765 = vrot.lane.b32.xlu0 %v1324, 112
    %v1766 = vpop.permute.xlu0 %1765
    %1767 = vrot.lane.b32.xlu0 %v1325, 112
    %v1768 = vpop.permute.xlu0 %1767
    %v1777 = vsel %vm760, 0.0, %v1585
    %v1778 = vsel %vm760, %v1528, %v1587
    %v1779 = vsel %vm760, %v1529, %v1589
    %v1780 = vsel %vm760, %v1530, %v1591
    %v1781 = vsel %vm760, %v1531, %v1593
    %v1782 = vsel %vm760, %v1532, %v1595
    %v1783 = vsel %vm760, %v1533, %v1597
    %v1784 = vsel %vm760, %v1534, %v1599
    %vm1785 = vcmask 261120
    %v1786 = vsel %vm1785, %v1777, %v1609
    %v1787 = vsel %vm1785, %v1778, %v1611
    %v1788 = vsel %vm1785, %v1779, %v1613
    %v1789 = vsel %vm1785, %v1780, %v1615
    %v1790 = vsel %vm1785, %v1781, %v1617
    %v1791 = vsel %vm1785, %v1782, %v1619
    %v1792 = vsel %vm1785, %v1783, %v1621
    %v1793 = vsel %vm1785, %v1784, %v1623
    %vm1794 = vcmask 392192
    %v1795 = vsel %vm1794, %v1786, %v1641
    %v1796 = vsel %vm1794, %v1787, %v1643
    %v1797 = vsel %vm1794, %v1788, %v1645
    %v1798 = vsel %vm1794, %v1789, %v1647
    %v1799 = vsel %vm1794, %v1790, %v1649
    %v1800 = vsel %vm1794, %v1791, %v1651
    %v1801 = vsel %vm1794, %v1792, %v1653
    %v1802 = vsel %vm1794, %v1793, %v1655
    %vm1803 = vcmask 523264
    %v1804 = vsel %vm1803, %v1795, %v1673
    %v1805 = vsel %vm1803, %v1796, %v1675
    %v1806 = vsel %vm1803, %v1797, %v1677
    %v1807 = vsel %vm1803, %v1798, %v1679
    %v1808 = vsel %vm1803, %v1799, %v1681
    %v1809 = vsel %vm1803, %v1800, %v1683
    %v1810 = vsel %vm1803, %v1801, %v1685
    %v1811 = vsel %vm1803, %v1802, %v1687
    %vm1812 = vcmask 654336
    %v1813 = vsel %vm1812, %v1804, %v1697
    %v1814 = vsel %vm1812, %v1805, %v1699
    %v1815 = vsel %vm1812, %v1806, %v1701
    %v1816 = vsel %vm1812, %v1807, %v1703
    %v1817 = vsel %vm1812, %v1808, %v1705
    %v1818 = vsel %vm1812, %v1809, %v1707
    %v1819 = vsel %vm1812, %v1810, %v1709
    %v1820 = vsel %vm1812, %v1811, %v1711
    %vm1821 = vcmask 785408
    %v1822 = vsel %vm1821, %v1813, %v1729
    %v1823 = vsel %vm1821, %v1814, %v1731
    %v1824 = vsel %vm1821, %v1815, %v1733
    %v1825 = vsel %vm1821, %v1816, %v1735
    %v1826 = vsel %vm1821, %v1817, %v1737
    %v1827 = vsel %vm1821, %v1818, %v1739
    %v1828 = vsel %vm1821, %v1819, %v1741
    %v1829 = vsel %vm1821, %v1820, %v1743
    %vm1830 = vcmask 916480
    %v1831 = vsel %vm1830, %v1822, %v1754
    %v1832 = vsel %vm1830, %v1823, %v1756
    %v1833 = vsel %vm1830, %v1824, %v1758
    %v1834 = vsel %vm1830, %v1825, %v1760
    %v1835 = vsel %vm1830, %v1826, %v1762
    %v1836 = vsel %vm1830, %v1827, %v1764
    %v1837 = vsel %vm1830, %v1828, %v1766
    %v1838 = vsel %vm1830, %v1829, %v1768
    %v1847 = vrot.slane %v1358, 7
    %v1848 = vrot.slane %v1359, 7
    %v1849 = vsel %vm1503, %v1847, %v1848
    %v1850 = vrot.slane %v1360, 7
    %v1851 = vsel %vm1503, %v1848, %v1850
    %v1852 = vrot.slane %v1361, 7
    %v1853 = vsel %vm1503, %v1850, %v1852
    %v1854 = vrot.slane %v1362, 7
    %v1855 = vsel %vm1503, %v1852, %v1854
    %v1856 = vrot.slane %v1363, 7
    %v1857 = vsel %vm1503, %v1854, %v1856
    %v1858 = vrot.slane %v1364, 7
    %v1859 = vsel %vm1503, %v1856, %v1858
    %v1860 = vrot.slane %v1365, 7
    %v1861 = vsel %vm1503, %v1858, %v1860
    %v1870 = vsel %vm1503, 0.0, %v1847
    %v1871 = vmul.f32 %v1870, %v1487
    %v1872 = vmul.f32 %v1849, %v1488
    %v1873 = vmul.f32 %v1851, %v1489
    %v1874 = vmul.f32 %v1853, %v1490
    %v1875 = vmul.f32 %v1855, %v1491
    %v1876 = vmul.f32 %v1857, %v1492
    %v1877 = vmul.f32 %v1859, %v1493
    %v1878 = vmul.f32 %v1861, %v1494
    %v1887 = vrot.slane %v1342, 7
    %v1888 = vrot.slane %v1343, 7
    %v1889 = vsel %vm1503, %v1887, %v1888
    %v1890 = vrot.slane %v1344, 7
    %v1891 = vsel %vm1503, %v1888, %v1890
    %v1892 = vrot.slane %v1345, 7
    %v1893 = vsel %vm1503, %v1890, %v1892
    %v1894 = vrot.slane %v1346, 7
    %v1895 = vsel %vm1503, %v1892, %v1894
    %v1896 = vrot.slane %v1347, 7
    %v1897 = vsel %vm1503, %v1894, %v1896
    %v1898 = vrot.slane %v1348, 7
    %v1899 = vsel %vm1503, %v1896, %v1898
    %v1900 = vrot.slane %v1349, 7
    %v1901 = vsel %vm1503, %v1898, %v1900
    %v1910 = vsel %vm1503, 0.0, %v1887
    %v1911 = vmul.f32 %v1910, %v1487
    %v1912 = vmul.f32 %v1889, %v1488
    %v1913 = vmul.f32 %v1891, %v1489
    %v1914 = vmul.f32 %v1893, %v1490
    %v1915 = vmul.f32 %v1895, %v1491
    %v1916 = vmul.f32 %v1897, %v1492
    %v1917 = vmul.f32 %v1899, %v1493
    %v1918 = vmul.f32 %v1901, %v1494
    %1926 = vrot.lane.b32.xlu0 %v1350, 16
    %v1927 = vpop.permute.xlu0 %1926
    %1928 = vrot.lane.b32.xlu0 %v1351, 16
    %v1929 = vpop.permute.xlu0 %1928
    %1930 = vrot.lane.b32.xlu0 %v1352, 16
    %v1931 = vpop.permute.xlu0 %1930
    %1932 = vrot.lane.b32.xlu0 %v1353, 16
    %v1933 = vpop.permute.xlu0 %1932
    %1934 = vrot.lane.b32.xlu0 %v1354, 16
    %v1935 = vpop.permute.xlu0 %1934
    %1936 = vrot.lane.b32.xlu0 %v1355, 16
    %v1937 = vpop.permute.xlu0 %1936
    %1938 = vrot.lane.b32.xlu0 %v1356, 16
    %v1939 = vpop.permute.xlu0 %1938
    %1947 = vrot.lane.b32.xlu0 %v1358, 32
    %v1948 = vpop.permute.xlu0 %1947
    %1949 = vrot.lane.b32.xlu0 %v1359, 32
    %v1950 = vpop.permute.xlu0 %1949
    %1951 = vrot.lane.b32.xlu0 %v1360, 32
    %v1952 = vpop.permute.xlu0 %1951
    %1953 = vrot.lane.b32.xlu0 %v1361, 32
    %v1954 = vpop.permute.xlu0 %1953
    %1955 = vrot.lane.b32.xlu0 %v1362, 32
    %v1956 = vpop.permute.xlu0 %1955
    %1957 = vrot.lane.b32.xlu0 %v1363, 32
    %v1958 = vpop.permute.xlu0 %1957
    %1959 = vrot.lane.b32.xlu0 %v1364, 32
    %v1960 = vpop.permute.xlu0 %1959
    %1976 = vrot.lane.b32.xlu0 %v1911, 48
    %v1977 = vpop.permute.xlu0 %1976
    %1978 = vrot.lane.b32.xlu0 %v1912, 48
    %v1979 = vpop.permute.xlu0 %1978
    %1980 = vrot.lane.b32.xlu0 %v1913, 48
    %v1981 = vpop.permute.xlu0 %1980
    %1982 = vrot.lane.b32.xlu0 %v1914, 48
    %v1983 = vpop.permute.xlu0 %1982
    %1984 = vrot.lane.b32.xlu0 %v1915, 48
    %v1985 = vpop.permute.xlu0 %1984
    %1986 = vrot.lane.b32.xlu0 %v1916, 48
    %v1987 = vpop.permute.xlu0 %1986
    %1988 = vrot.lane.b32.xlu0 %v1917, 48
    %v1989 = vpop.permute.xlu0 %1988
    %1990 = vrot.lane.b32.xlu0 %v1918, 48
    %v1991 = vpop.permute.xlu0 %1990
    %2008 = vrot.lane.b32.xlu0 %v1334, 64
    %v2009 = vpop.permute.xlu0 %2008
    %2010 = vrot.lane.b32.xlu0 %v1335, 64
    %v2011 = vpop.permute.xlu0 %2010
    %2012 = vrot.lane.b32.xlu0 %v1336, 64
    %v2013 = vpop.permute.xlu0 %2012
    %2014 = vrot.lane.b32.xlu0 %v1337, 64
    %v2015 = vpop.permute.xlu0 %2014
    %2016 = vrot.lane.b32.xlu0 %v1338, 64
    %v2017 = vpop.permute.xlu0 %2016
    %2018 = vrot.lane.b32.xlu0 %v1339, 64
    %v2019 = vpop.permute.xlu0 %2018
    %2020 = vrot.lane.b32.xlu0 %v1340, 64
    %v2021 = vpop.permute.xlu0 %2020
    %2022 = vrot.lane.b32.xlu0 %v1341, 64
    %v2023 = vpop.permute.xlu0 %2022
    %2032 = vrot.lane.b32.xlu0 %v1342, 80
    %v2033 = vpop.permute.xlu0 %2032
    %2034 = vrot.lane.b32.xlu0 %v1343, 80
    %v2035 = vpop.permute.xlu0 %2034
    %2036 = vrot.lane.b32.xlu0 %v1344, 80
    %v2037 = vpop.permute.xlu0 %2036
    %2038 = vrot.lane.b32.xlu0 %v1345, 80
    %v2039 = vpop.permute.xlu0 %2038
    %2040 = vrot.lane.b32.xlu0 %v1346, 80
    %v2041 = vpop.permute.xlu0 %2040
    %2042 = vrot.lane.b32.xlu0 %v1347, 80
    %v2043 = vpop.permute.xlu0 %2042
    %2044 = vrot.lane.b32.xlu0 %v1348, 80
    %v2045 = vpop.permute.xlu0 %2044
    %2046 = vrot.lane.b32.xlu0 %v1349, 80
    %v2047 = vpop.permute.xlu0 %2046
    %2064 = vrot.lane.b32.xlu0 %v1871, 96
    %v2065 = vpop.permute.xlu0 %2064
    %2066 = vrot.lane.b32.xlu0 %v1872, 96
    %v2067 = vpop.permute.xlu0 %2066
    %2068 = vrot.lane.b32.xlu0 %v1873, 96
    %v2069 = vpop.permute.xlu0 %2068
    %2070 = vrot.lane.b32.xlu0 %v1874, 96
    %v2071 = vpop.permute.xlu0 %2070
    %2072 = vrot.lane.b32.xlu0 %v1875, 96
    %v2073 = vpop.permute.xlu0 %2072
    %2074 = vrot.lane.b32.xlu0 %v1876, 96
    %v2075 = vpop.permute.xlu0 %2074
    %2076 = vrot.lane.b32.xlu0 %v1877, 96
    %v2077 = vpop.permute.xlu0 %2076
    %2078 = vrot.lane.b32.xlu0 %v1878, 96
    %v2079 = vpop.permute.xlu0 %2078
    %2089 = vrot.lane.b32.xlu0 %v1350, 112
    %v2090 = vpop.permute.xlu0 %2089
    %2091 = vrot.lane.b32.xlu0 %v1351, 112
    %v2092 = vpop.permute.xlu0 %2091
    %2093 = vrot.lane.b32.xlu0 %v1352, 112
    %v2094 = vpop.permute.xlu0 %2093
    %2095 = vrot.lane.b32.xlu0 %v1353, 112
    %v2096 = vpop.permute.xlu0 %2095
    %2097 = vrot.lane.b32.xlu0 %v1354, 112
    %v2098 = vpop.permute.xlu0 %2097
    %2099 = vrot.lane.b32.xlu0 %v1355, 112
    %v2100 = vpop.permute.xlu0 %2099
    %2101 = vrot.lane.b32.xlu0 %v1356, 112
    %v2102 = vpop.permute.xlu0 %2101
    %2103 = vrot.lane.b32.xlu0 %v1357, 112
    %v2104 = vpop.permute.xlu0 %2103
    %v2113 = vsel %vm760, %v1871, %v1927
    %v2114 = vsel %vm760, %v1872, %v1929
    %v2115 = vsel %vm760, %v1873, %v1931
    %v2116 = vsel %vm760, %v1874, %v1933
    %v2117 = vsel %vm760, %v1875, %v1935
    %v2118 = vsel %vm760, %v1876, %v1937
    %v2119 = vsel %vm760, %v1877, %v1939
    %v2120 = vsel %vm1785, %v2113, %v1948
    %v2121 = vsel %vm1785, %v2114, %v1950
    %v2122 = vsel %vm1785, %v2115, %v1952
    %v2123 = vsel %vm1785, %v2116, %v1954
    %v2124 = vsel %vm1785, %v2117, %v1956
    %v2125 = vsel %vm1785, %v2118, %v1958
    %v2126 = vsel %vm1785, %v2119, %v1960
    %v2127 = vsel %vm1794, %v1786, %v1977
    %v2128 = vsel %vm1794, %v2120, %v1979
    %v2129 = vsel %vm1794, %v2121, %v1981
    %v2130 = vsel %vm1794, %v2122, %v1983
    %v2131 = vsel %vm1794, %v2123, %v1985
    %v2132 = vsel %vm1794, %v2124, %v1987
    %v2133 = vsel %vm1794, %v2125, %v1989
    %v2134 = vsel %vm1794, %v2126, %v1991
    %v2135 = vsel %vm1803, %v2127, %v2009
    %v2136 = vsel %vm1803, %v2128, %v2011
    %v2137 = vsel %vm1803, %v2129, %v2013
    %v2138 = vsel %vm1803, %v2130, %v2015
    %v2139 = vsel %vm1803, %v2131, %v2017
    %v2140 = vsel %vm1803, %v2132, %v2019
    %v2141 = vsel %vm1803, %v2133, %v2021
    %v2142 = vsel %vm1803, %v2134, %v2023
    %v2143 = vsel %vm1812, %v2135, %v2033
    %v2144 = vsel %vm1812, %v2136, %v2035
    %v2145 = vsel %vm1812, %v2137, %v2037
    %v2146 = vsel %vm1812, %v2138, %v2039
    %v2147 = vsel %vm1812, %v2139, %v2041
    %v2148 = vsel %vm1812, %v2140, %v2043
    %v2149 = vsel %vm1812, %v2141, %v2045
    %v2150 = vsel %vm1812, %v2142, %v2047
    %v2151 = vsel %vm1821, %v2143, %v2065
    %v2152 = vsel %vm1821, %v2144, %v2067
    %v2153 = vsel %vm1821, %v2145, %v2069
    %v2154 = vsel %vm1821, %v2146, %v2071
    %v2155 = vsel %vm1821, %v2147, %v2073
    %v2156 = vsel %vm1821, %v2148, %v2075
    %v2157 = vsel %vm1821, %v2149, %v2077
    %v2158 = vsel %vm1821, %v2150, %v2079
    %v2159 = vsel %vm1830, %v2151, %v2090
    %v2160 = vsel %vm1830, %v2152, %v2092
    %v2161 = vsel %vm1830, %v2153, %v2094
    %v2162 = vsel %vm1830, %v2154, %v2096
    %v2163 = vsel %vm1830, %v2155, %v2098
    %v2164 = vsel %vm1830, %v2156, %v2100
    %v2165 = vsel %vm1830, %v2157, %v2102
    %v2166 = vsel %vm1830, %v2158, %v2104
    %v2167 = vld [vmem:[%s5] sm:$0xff]
    %v2168 = vld [vmem:[%s5 + $0x8] sm:$0xff]
    %v2169 = vld [vmem:[%s5 + $0x10] sm:$0xff]
    %v2170 = vld [vmem:[%s5 + $0x18] sm:$0xff]
    %v2171 = vld [vmem:[%s5 + $0x20] sm:$0xff]
    %v2172 = vld [vmem:[%s5 + $0x28] sm:$0xff]
    %v2173 = vld [vmem:[%s5 + $0x30] sm:$0xff]
    %v2174 = vld [vmem:[%s5 + $0x38] sm:$0xff]
    %v2175 = vld [vmem:[%s5 + $0x40] sm:$0xff]
    %v2176 = vld [vmem:[%s5 + $0x48] sm:$0xff]
    %v2177 = vld [vmem:[%s5 + $0x50] sm:$0xff]
    %v2178 = vld [vmem:[%s5 + $0x58] sm:$0xff]
    %v2179 = vld [vmem:[%s5 + $0x60] sm:$0xff]
    %v2180 = vld [vmem:[%s5 + $0x68] sm:$0xff]
    %v2181 = vld [vmem:[%s5 + $0x70] sm:$0xff]
    %v2182 = vld [vmem:[%s5 + $0x78] sm:$0xff]
    %v2183 = vld [vmem:[%s5 + $0x80] sm:$0xff]
    %v2184 = vld [vmem:[%s5 + $0x88] sm:$0xff]
    %v2185 = vld [vmem:[%s6] sm:$0x1]
    %v2187 = vlaneseq
    %v2188 = vshrl.u32 %v2187, 7
    %v2189 = vsub.s32 0, %v2188
    %v2190 = vrot.slane %v2185, %v2189
    %v2192 = vsel %vm760, %v1326, 0
    %v2194 = vsel %vm760, %v1327, 0
    %v2196 = vsel %vm760, %v1328, 0
    %v2198 = vsel %vm760, %v1329, 0
    %v2200 = vsel %vm760, %v1330, 0
    %v2202 = vsel %vm760, %v1331, 0
    %v2204 = vsel %vm760, %v1332, 0
    %v2206 = vsel %vm760, %v1333, 0
    %v2208 = vsel %vm760, %v1358, 0
    %v2210 = vsel %vm760, %v1359, 0
    %v2212 = vsel %vm760, %v1360, 0
    %v2214 = vsel %vm760, %v1361, 0
    %v2216 = vsel %vm760, %v1362, 0
    %v2218 = vsel %vm760, %v1363, 0
    %v2220 = vsel %vm760, %v1364, 0
    %v2222 = vsel %vm760, %v1365, 0
    %2224 = vmatprep.subr.mxu0 0.0
    %2225 = vmatpush1.msra.mxu0 %v2167
    %2226 = vmatprep.subr.mxu0 0.0
    %2227 = vmatpush1.msra.mxu0 %v2168
    %2228 = vmatprep.subr.mxu0 0.0
    %2229 = vmatpush1.msra.mxu0 %v2169
    %2230 = vmatprep.subr.mxu0 0.0
    %2231 = vmatpush1.msra.mxu0 %v2170
    %2232 = vmatprep.subr.mxu0 0.0
    %2233 = vmatpush1.msra.mxu0 %v2171
    %2234 = vmatprep.subr.mxu0 0.0
    %2235 = vmatpush1.msra.mxu0 %v2172
    %2236 = vmatprep.subr.mxu0 0.0
    %2237 = vmatpush1.msra.mxu0 %v2173
    %2238 = vmatprep.subr.mxu0 0.0
    %2239 = vmatpush1.msra.mxu0 %v2174
    %2240 = vmatprep.subr.mxu0 0.0
    %2241 = vmatpush1.msra.mxu0 %v2175
    %2242 = vmatprep.subr.mxu0 0.0
    %2243 = vmatpush1.msra.mxu0 %v2176
    %2244 = vmatprep.subr.mxu0 0.0
    %2245 = vmatpush1.msra.mxu0 %v2177
    %2246 = vmatprep.subr.mxu0 0.0
    %2247 = vmatpush1.msra.mxu0 %v2178
    %2248 = vmatprep.subr.mxu0 0.0
    %2249 = vmatpush1.msra.mxu0 %v2179
    %2250 = vmatprep.subr.mxu0 0.0
    %2251 = vmatpush1.msra.mxu0 %v2180
    %2252 = vmatprep.subr.mxu0 0.0
    %2253 = vmatpush1.msra.mxu0 %v2181
    %2254 = vmatprep.subr.mxu0 0.0
    %2255 = vmatpush1.msra.mxu0 %v2182
    %2256 = vmatprep.subr.mxu0 0.0
    %2257 = vmatpush1.msra.mxu0 %v2183
    %2258 = vmatprep.subr.mxu0 0.0
    %2259 = vmatpush1.msra.mxu0 %v2184
    %2260 = vmatprep.subr.mxu0 0.0
    %2261 = vmatpush1.msra.mxu0 0.0
    %2262 = vmatprep.subr.mxu0 0.0
    %2263 = vmatpush1.msra.mxu0 0.0
    %2264 = vmatprep.subr.mxu0 0.0
    %2265 = vmatpush1.msra.mxu0 0.0
    %2266 = vmatprep.subr.mxu0 0.0
    %2267 = vmatpush1.msra.mxu0 0.0
    %2268 = vmatprep.subr.mxu0 0.0
    %2269 = vmatpush1.msra.mxu0 0.0
    %2270 = vmatprep.subr.mxu0 0.0
    %2271 = vmatpush1.msra.mxu0 0.0
    %2272 = vmatprep.subr.mxu0 0.0
    %2273 = vmatpush1.msra.mxu0 0.0
    %2274 = vmatprep.subr.mxu0 0.0
    %2275 = vmatpush1.msra.mxu0 0.0
    %2276 = vmatprep.subr.mxu0 0.0
    %2277 = vmatpush1.msra.mxu0 0.0
    %2278 = vmatprep.subr.mxu0 0.0
    %2279 = vmatpush1.msra.mxu0 0.0
    %2280 = vmatprep.subr.mxu0 0.0
    %2281 = vmatpush1.msra.mxu0 0.0
    %2282 = vmatprep.subr.mxu0 0.0
    %2283 = vmatpush1.msra.mxu0 0.0
    %2284 = vmatprep.subr.mxu0 0.0
    %2285 = vmatpush1.msra.mxu0 0.0
    %2286 = vmatprep.subr.mxu0 0.0
    %2287 = vmatpush1.msra.mxu0 0.0
    %2288 = vmatprep.mubr.f32.mxu0 %v2192
    %2289 = vmatmul.mubr.f32.gmra.mrb[0].mxu0 %v1831
    %v2290 = vpop.f32.mrb[0].mxu0
    %v2291 = vadd.f32 %v2190, %v2290
    %v2292 = vpop.f32.mrb[0].mxu0
    %2293 = vmatprep.mubr.f32.mxu0 %v2194
    %2294 = vmatmul.mubr.f32.gmra.mrb[0].mxu0 %v1832
    %v2295 = vpop.f32.mrb[0].mxu0
    %v2296 = vadd.f32 %v2190, %v2295
    %v2297 = vpop.f32.mrb[0].mxu0
    %2298 = vmatprep.mubr.f32.mxu0 %v2196
    %2299 = vmatmul.mubr.f32.gmra.mrb[0].mxu0 %v1833
    %v2300 = vpop.f32.mrb[0].mxu0
    %v2301 = vadd.f32 %v2190, %v2300
    %v2302 = vpop.f32.mrb[0].mxu0
    %2303 = vmatprep.mubr.f32.mxu0 %v2198
    %2304 = vmatmul.mubr.f32.gmra.mrb[0].mxu0 %v1834
    %v2305 = vpop.f32.mrb[0].mxu0
    %v2306 = vadd.f32 %v2190, %v2305
    %v2307 = vpop.f32.mrb[0].mxu0
    %2308 = vmatprep.mubr.f32.mxu0 %v2200
    %2309 = vmatmul.mubr.f32.gmra.mrb[0].mxu0 %v1835
    %v2310 = vpop.f32.mrb[0].mxu0
    %v2311 = vadd.f32 %v2190, %v2310
    %v2312 = vpop.f32.mrb[0].mxu0
    %2313 = vmatprep.mubr.f32.mxu0 %v2202
    %2314 = vmatmul.mubr.f32.gmra.mrb[0].mxu0 %v1836
    %v2315 = vpop.f32.mrb[0].mxu0
    %v2316 = vadd.f32 %v2190, %v2315
    %v2317 = vpop.f32.mrb[0].mxu0
    %2318 = vmatprep.mubr.f32.mxu0 %v2204
    %2319 = vmatmul.mubr.f32.gmra.mrb[0].mxu0 %v1837
    %v2320 = vpop.f32.mrb[0].mxu0
    %v2321 = vadd.f32 %v2190, %v2320
    %v2322 = vpop.f32.mrb[0].mxu0
    %2323 = vmatprep.mubr.f32.mxu0 %v2206
    %2324 = vmatmul.mubr.f32.gmra.mrb[0].mxu0 %v1838
    %v2325 = vpop.f32.mrb[0].mxu0
    %v2326 = vadd.f32 %v2190, %v2325
    %v2327 = vpop.f32.mrb[0].mxu0
    %2328 = vmatprep.mubr.f32.mxu0 %v2208
    %2329 = vmatmul.mubr.f32.gmra.mrb[0].mxu0 %v2159
    %v2330 = vpop.f32.mrb[0].mxu0
    %v2331 = vadd.f32 %v2190, %v2330
    %v2332 = vpop.f32.mrb[0].mxu0
    %2333 = vmatprep.mubr.f32.mxu0 %v2210
    %2334 = vmatmul.mubr.f32.gmra.mrb[0].mxu0 %v2160
    %v2335 = vpop.f32.mrb[0].mxu0
    %v2336 = vadd.f32 %v2190, %v2335
    %v2337 = vpop.f32.mrb[0].mxu0
    %2338 = vmatprep.mubr.f32.mxu0 %v2212
    %2339 = vmatmul.mubr.f32.gmra.mrb[0].mxu0 %v2161
    %v2340 = vpop.f32.mrb[0].mxu0
    %v2341 = vadd.f32 %v2190, %v2340
    %v2342 = vpop.f32.mrb[0].mxu0
    %2343 = vmatprep.mubr.f32.mxu0 %v2214
    %2344 = vmatmul.mubr.f32.gmra.mrb[0].mxu0 %v2162
    %v2345 = vpop.f32.mrb[0].mxu0
    %v2346 = vadd.f32 %v2190, %v2345
    %v2347 = vpop.f32.mrb[0].mxu0
    %2348 = vmatprep.mubr.f32.mxu0 %v2216
    %2349 = vmatmul.mubr.f32.gmra.mrb[0].mxu0 %v2163
    %v2350 = vpop.f32.mrb[0].mxu0
    %v2351 = vadd.f32 %v2190, %v2350
    %v2352 = vpop.f32.mrb[0].mxu0
    %2353 = vmatprep.mubr.f32.mxu0 %v2218
    %2354 = vmatmul.mubr.f32.gmra.mrb[0].mxu0 %v2164
    %v2355 = vpop.f32.mrb[0].mxu0
    %v2356 = vadd.f32 %v2190, %v2355
    %v2357 = vpop.f32.mrb[0].mxu0
    %2358 = vmatprep.mubr.f32.mxu0 %v2220
    %2359 = vmatmul.mubr.f32.gmra.mrb[0].mxu0 %v2165
    %v2360 = vpop.f32.mrb[0].mxu0
    %v2361 = vadd.f32 %v2190, %v2360
    %v2362 = vpop.f32.mrb[0].mxu0
    %2363 = vmatprep.mubr.f32.mxu0 %v2222
    %2364 = vmatmul.mubr.f32.gmra.mrb[0].mxu0 %v2166
    %v2365 = vpop.f32.mrb[0].mxu0
    %v2366 = vadd.f32 %v2190, %v2365
    %v2367 = vpop.f32.mrb[0].mxu0
    %2368 = vdwg.mxu0
    %v2369 = vmax.f32 %v2291, 0.0
    %v2370 = vmax.f32 %v2296, 0.0
    %v2371 = vmax.f32 %v2301, 0.0
    %v2372 = vmax.f32 %v2306, 0.0
    %v2373 = vmax.f32 %v2311, 0.0
    %v2374 = vmax.f32 %v2316, 0.0
    %v2375 = vmax.f32 %v2321, 0.0
    %v2376 = vmax.f32 %v2326, 0.0
    %v2377 = vmax.f32 %v2331, 0.0
    %v2378 = vmax.f32 %v2336, 0.0
    %v2379 = vmax.f32 %v2341, 0.0
    %v2380 = vmax.f32 %v2346, 0.0
    %v2381 = vmax.f32 %v2351, 0.0
    %v2382 = vmax.f32 %v2356, 0.0
    %v2383 = vmax.f32 %v2361, 0.0
    %v2384 = vmax.f32 %v2366, 0.0
    %v2385 = vsel %vm1785, %v2369, 0.0
    %v2386 = vsel %vm1785, %v2370, 0.0
    %v2387 = vadd.f32 %v2385, %v2386
    %v2388 = vsel %vm1785, %v2371, 0.0
    %v2389 = vadd.f32 %v2387, %v2388
    %v2390 = vsel %vm1785, %v2372, 0.0
    %v2391 = vadd.f32 %v2389, %v2390
    %v2392 = vsel %vm1785, %v2373, 0.0
    %v2393 = vadd.f32 %v2391, %v2392
    %v2394 = vsel %vm1785, %v2374, 0.0
    %v2395 = vadd.f32 %v2393, %v2394
    %v2396 = vsel %vm1785, %v2375, 0.0
    %v2397 = vadd.f32 %v2395, %v2396
    %v2398 = vsel %vm1785, %v2376, 0.0
    %v2399 = vadd.f32 %v2397, %v2398
    %v2400 = vrot.slane %v2399, 4
    %v2401 = vadd.f32 %v2399, %v2400
    %v2402 = vrot.slane %v2401, 2
    %v2403 = vadd.f32 %v2401, %v2402
    %v2404 = vrot.slane %v2403, 1
    %v2405 = vadd.f32 %v2403, %v2404
    %v2406 = vrcp.pop 64.0
    %v2407 = vmul.f32 %v2405, %v2406
    %v2408 = vsel %vm1785, %v2377, 0.0
    %v2409 = vsel %vm1785, %v2378, 0.0
    %v2410 = vadd.f32 %v2408, %v2409
    %v2411 = vsel %vm1785, %v2379, 0.0
    %v2412 = vadd.f32 %v2410, %v2411
    %v2413 = vsel %vm1785, %v2380, 0.0
    %v2414 = vadd.f32 %v2412, %v2413
    %v2415 = vsel %vm1785, %v2381, 0.0
    %v2416 = vadd.f32 %v2414, %v2415
    %v2417 = vsel %vm1785, %v2382, 0.0
    %v2418 = vadd.f32 %v2416, %v2417
    %v2419 = vsel %vm1785, %v2383, 0.0
    %v2420 = vadd.f32 %v2418, %v2419
    %v2421 = vsel %vm1785, %v2384, 0.0
    %v2422 = vadd.f32 %v2420, %v2421
    %v2423 = vrot.slane %v2422, 4
    %v2424 = vadd.f32 %v2422, %v2423
    %v2425 = vrot.slane %v2424, 2
    %v2426 = vadd.f32 %v2424, %v2425
    %v2427 = vrot.slane %v2426, 1
    %v2428 = vadd.f32 %v2426, %v2427
    %v2429 = vmul.f32 %v2428, %v2406
    %v2430 = vsel %vm1503, %v2407, %v2429
    %v2431 = vld [vmem:[%s7] sm:$0xff]
    %v2432 = vld [vmem:[%s7 + $0x8] sm:$0xff]
    %v2433 = vld [vmem:[%s7 + $0x10] sm:$0xff]
    %v2434 = vld [vmem:[%s7 + $0x18] sm:$0xff]
    %v2435 = vld [vmem:[%s8] sm:$0x1]
    %v2437 = vlaneseq
    %v2438 = vshrl.u32 %v2437, 7
    %v2439 = vsub.s32 0, %v2438
    %v2440 = vrot.slane %v2435, %v2439
    %v2443 = vsel %vm1785, %v2430, 0
    %2445 = vmatprep.subr.mxu0 0.0
    %2446 = vmatpush1.msra.mxu0 %v2431
    %2447 = vmatprep.subr.mxu0 0.0
    %2448 = vmatpush1.msra.mxu0 %v2432
    %2449 = vmatprep.subr.mxu0 0.0
    %2450 = vmatpush1.msra.mxu0 %v2433
    %2451 = vmatprep.subr.mxu0 0.0
    %2452 = vmatpush1.msra.mxu0 %v2434
    %2453 = vmatprep.subr.mxu0 0.0
    %2454 = vmatpush1.msra.mxu0 0.0
    %2455 = vmatprep.subr.mxu0 0.0
    %2456 = vmatpush1.msra.mxu0 0.0
    %2457 = vmatprep.subr.mxu0 0.0
    %2458 = vmatpush1.msra.mxu0 0.0
    %2459 = vmatprep.subr.mxu0 0.0
    %2460 = vmatpush1.msra.mxu0 0.0
    %2461 = vmatprep.subr.mxu0 0.0
    %2462 = vmatpush1.msra.mxu0 0.0
    %2463 = vmatprep.subr.mxu0 0.0
    %2464 = vmatpush1.msra.mxu0 0.0
    %2465 = vmatprep.subr.mxu0 0.0
    %2466 = vmatpush1.msra.mxu0 0.0
    %2467 = vmatprep.subr.mxu0 0.0
    %2468 = vmatpush1.msra.mxu0 0.0
    %2469 = vmatprep.subr.mxu0 0.0
    %2470 = vmatpush1.msra.mxu0 0.0
    %2471 = vmatprep.subr.mxu0 0.0
    %2472 = vmatpush1.msra.mxu0 0.0
    %2473 = vmatprep.subr.mxu0 0.0
    %2474 = vmatpush1.msra.mxu0 0.0
    %2475 = vmatprep.subr.mxu0 0.0
    %2476 = vmatpush1.msra.mxu0 0.0
    %2477 = vmatprep.subr.mxu0 0.0
    %2478 = vmatpush1.msra.mxu0 0.0
    %2479 = vmatprep.subr.mxu0 0.0
    %2480 = vmatpush1.msra.mxu0 0.0
    %2481 = vmatprep.subr.mxu0 0.0
    %2482 = vmatpush1.msra.mxu0 0.0
    %2483 = vmatprep.subr.mxu0 0.0
    %2484 = vmatpush1.msra.mxu0 0.0
    %2485 = vmatprep.subr.mxu0 0.0
    %2486 = vmatpush1.msra.mxu0 0.0
    %2487 = vmatprep.subr.mxu0 0.0
    %2488 = vmatpush1.msra.mxu0 0.0
    %2489 = vmatprep.subr.mxu0 0.0
    %2490 = vmatpush1.msra.mxu0 0.0
    %2491 = vmatprep.subr.mxu0 0.0
    %2492 = vmatpush1.msra.mxu0 0.0
    %2493 = vmatprep.subr.mxu0 0.0
    %2494 = vmatpush1.msra.mxu0 0.0
    %2495 = vmatprep.subr.mxu0 0.0
    %2496 = vmatpush1.msra.mxu0 0.0
    %2497 = vmatprep.subr.mxu0 0.0
    %2498 = vmatpush1.msra.mxu0 0.0
    %2499 = vmatprep.subr.mxu0 0.0
    %2500 = vmatpush1.msra.mxu0 0.0
    %2501 = vmatprep.subr.mxu0 0.0
    %2502 = vmatpush1.msra.mxu0 0.0
    %2503 = vmatprep.subr.mxu0 0.0
    %2504 = vmatpush1.msra.mxu0 0.0
    %2505 = vmatprep.subr.mxu0 0.0
    %2506 = vmatpush1.msra.mxu0 0.0
    %2507 = vmatprep.subr.mxu0 0.0
    %2508 = vmatpush1.msra.mxu0 0.0
    %2509 = vmatprep.mubr.f32.mxu0 0.0
    %2510 = vmatmul.mubr.f32.gmra.mrb[0].mxu0 %v2443
    %v2511 = vpop.f32.mrb[0].mxu0
    %v2512 = vadd.f32 %v2440, %v2511
    %v2513 = vpop.f32.mrb[0].mxu0
    %2514 = vdwg.mxu0
    %v2515 = vmax.f32 %v2512, 0.0
    %v2516 = vld [vmem:[%s9] sm:$0xff]
    %v2517 = vld [vmem:[%s9 + $0x8] sm:$0xff]
    %v2518 = vld [vmem:[%s9 + $0x10] sm:$0xff]
    %v2519 = vld [vmem:[%s9 + $0x18] sm:$0xff]
    %v2520 = vld [vmem:[%s9 + $0x20] sm:$0xff]
    %v2521 = vld [vmem:[%s9 + $0x28] sm:$0xff]
    %v2522 = vld [vmem:[%s9 + $0x30] sm:$0xff]
    %v2523 = vld [vmem:[%s9 + $0x38] sm:$0xff]
    %v2524 = vld [vmem:[%s10] sm:$0x1]
    %v2526 = vlaneseq
    %v2527 = vshrl.u32 %v2526, 7
    %v2528 = vsub.s32 0, %v2527
    %v2529 = vrot.slane %v2524, %v2528
    %v2532 = vsel %vm1803, %v2515, 0
    %2534 = vmatprep.subr.mxu0 0.0
    %2535 = vmatpush1.msra.mxu0 %v2516
    %2536 = vmatprep.subr.mxu0 0.0
    %2537 = vmatpush1.msra.mxu0 %v2517
    %2538 = vmatprep.subr.mxu0 0.0
    %2539 = vmatpush1.msra.mxu0 %v2518
    %2540 = vmatprep.subr.mxu0 0.0
    %2541 = vmatpush1.msra.mxu0 %v2519
    %2542 = vmatprep.subr.mxu0 0.0
    %2543 = vmatpush1.msra.mxu0 %v2520
    %2544 = vmatprep.subr.mxu0 0.0
    %2545 = vmatpush1.msra.mxu0 %v2521
    %2546 = vmatprep.subr.mxu0 0.0
    %2547 = vmatpush1.msra.mxu0 %v2522
    %2548 = vmatprep.subr.mxu0 0.0
    %2549 = vmatpush1.msra.mxu0 %v2523
    %2550 = vmatprep.subr.mxu0 0.0
    %2551 = vmatpush1.msra.mxu0 0.0
    %2552 = vmatprep.subr.mxu0 0.0
    %2553 = vmatpush1.msra.mxu0 0.0
    %2554 = vmatprep.subr.mxu0 0.0
    %2555 = vmatpush1.msra.mxu0 0.0
    %2556 = vmatprep.subr.mxu0 0.0
    %2557 = vmatpush1.msra.mxu0 0.0
    %2558 = vmatprep.subr.mxu0 0.0
    %2559 = vmatpush1.msra.mxu0 0.0
    %2560 = vmatprep.subr.mxu0 0.0
    %2561 = vmatpush1.msra.mxu0 0.0
    %2562 = vmatprep.subr.mxu0 0.0
    %2563 = vmatpush1.msra.mxu0 0.0
    %2564 = vmatprep.subr.mxu0 0.0
    %2565 = vmatpush1.msra.mxu0 0.0
    %2566 = vmatprep.subr.mxu0 0.0
    %2567 = vmatpush1.msra.mxu0 0.0
    %2568 = vmatprep.subr.mxu0 0.0
    %2569 = vmatpush1.msra.mxu0 0.0
    %2570 = vmatprep.subr.mxu0 0.0
    %2571 = vmatpush1.msra.mxu0 0.0
    %2572 = vmatprep.subr.mxu0 0.0
    %2573 = vmatpush1.msra.mxu0 0.0
    %2574 = vmatprep.subr.mxu0 0.0
    %2575 = vmatpush1.msra.mxu0 0.0
    %2576 = vmatprep.subr.mxu0 0.0
    %2577 = vmatpush1.msra.mxu0 0.0
    %2578 = vmatprep.subr.mxu0 0.0
    %2579 = vmatpush1.msra.mxu0 0.0
    %2580 = vmatprep.subr.mxu0 0.0
    %2581 = vmatpush1.msra.mxu0 0.0
    %2582 = vmatprep.subr.mxu0 0.0
    %2583 = vmatpush1.msra.mxu0 0.0
    %2584 = vmatprep.subr.mxu0 0.0
    %2585 = vmatpush1.msra.mxu0 0.0
    %2586 = vmatprep.subr.mxu0 0.0
    %2587 = vmatpush1.msra.mxu0 0.0
    %2588 = vmatprep.subr.mxu0 0.0
    %2589 = vmatpush1.msra.mxu0 0.0
    %2590 = vmatprep.subr.mxu0 0.0
    %2591 = vmatpush1.msra.mxu0 0.0
    %2592 = vmatprep.subr.mxu0 0.0
    %2593 = vmatpush1.msra.mxu0 0.0
    %2594 = vmatprep.subr.mxu0 0.0
    %2595 = vmatpush1.msra.mxu0 0.0
    %2596 = vmatprep.subr.mxu0 0.0
    %2597 = vmatpush1.msra.mxu0 0.0
    %2598 = vmatprep.mubr.f32.mxu0 0.0
    %2599 = vmatmul.mubr.f32.gmra.mrb[0].mxu0 %v2532
    %v2600 = vpop.f32.mrb[0].mxu0
    %v2601 = vadd.f32 %v2529, %v2600
    %v2602 = vpop.f32.mrb[0].mxu0
    %2603 = vdwg.mxu0
    %vm2604 = vcmask 74752
    %2605 = vst.msk [vmem:[#allocation2] sm:$0x3] %vm2604, %v2601
    // Predicated region
    $region46: #{tiny_model_forward.1} parent=1 // pred_check
      _
    $region47: #{tiny_model_forward.1} parent=1 // pred_check_branch
      %2607 = sbr.rel (0) target = $region49
    $region48: #{tiny_model_forward.1} parent=1 // pred_region
      %s2609 = ssub.s32 32, 32
      %2610 = vsyncadd [#allocation3], %s2609
      %s2612 = sshll.u32 [#allocation2], 4
      %s2613 = int_to_ptr.vmem [resolvable:$true] %s2612
      %2615 = dma.vmem_to_hbm [thread:$0]  %s2613, 32, %s11, [#allocation3]
    $region49: #{tiny_model_forward.1} parent=1 // pred_fallthru
      _
    // Predicated region
    $region50: #{tiny_model_forward.1} parent=1 // pred_check
      _
    $region51: #{tiny_model_forward.1} parent=1 // pred_check_branch
      %2617 = sbr.rel (0) target = $region53
    $region52: #{tiny_model_forward.1} parent=1 // pred_region
      %2618 = dma.done [#allocation3], 32
    $region53: #{tiny_model_forward.1} parent=1 // pred_fallthru
      _
    %2619 = vsyncpa [#allocation3], 1

</llo_original>
